<compile_context>
chip_gen: v7x
topology: tpu7x:2x2x1
jax: 0.10.0
libtpu: 0.0.40
codegen_flags: <defaults>
</compile_context>

<pallas_src>
import math

import jax
import jax.numpy as jnp
from jax.experimental import pallas as pl
from jax.experimental.pallas import tpu as pltpu


def _round_up(x, m):
    return ((x + m - 1) // m) * m


# ----------------------------- Pallas kernel --------------------------------
def _make_ffn_mkm_kernel(half_descs):
    """half_descs: per half, a tuple of (I1, I2, O1, O2) per expansion."""
    half_descs = tuple(tuple(tuple(d) for d in h) for h in half_descs)

    def kernel(*refs):
        # refs = [x_ref,
        #         (half0: w1t_e..., a_flat_e..., bias0),
        #         (half1: w1t_e..., a_flat_e..., bias1),
        #         o_ref]
        x_ref = refs[0]
        o_ref = refs[-1]
        wrefs = refs[1:-1]

        x = x_ref[...]                      # [tb, I]
        halves = []
        pos = 0
        for descs in half_descs:
            n_e = len(descs)
            w1t_refs = wrefs[pos:pos + n_e]; pos += n_e
            a_refs = wrefs[pos:pos + n_e]; pos += n_e
            bias_ref = wrefs[pos]; pos += 1

            half_acc = None
            for e, (I1, I2, O1, O2) in enumerate(descs):
                w1t = w1t_refs[e][...]      # [I1, O1]  (VMEM, weight-stationary)
                a = a_refs[e]               # [O2*I2]   (SMEM scalars)
                cols = [None] * O2
                for i2 in range(I2):        # I2 = f1 (small), unrolled at trace time
                    xi = x[:, i2 * I1:(i2 + 1) * I1]                    # [tb, I1]
                    u = jnp.dot(xi, w1t,
                                preferred_element_type=jnp.float32)     # MXU, [tb, O1]
                    for o2 in range(O2):    # O2 = f2 (small), unrolled
                        term = a[o2 * I2 + i2] * u                      # VPU scalar MAC
                        cols[o2] = term if cols[o2] is None else cols[o2] + term
                contrib = jnp.concatenate(cols, axis=-1)                # [tb, O_half]
                half_acc = contrib if half_acc is None else half_acc + contrib
            halves.append(half_acc + bias_ref[...].astype(jnp.float32))

        out = jnp.concatenate(halves, axis=-1)                          # [tb, 2*O_half]
        o_ref[...] = out.astype(o_ref.dtype)        # single lane-dense full-width store

    return kernel


# ------------------------------ host wrapper ---------------------------------
def ffn_mkm_forward(x, half_params, *, block_b=None):
    """half_params: tuple of two (w1t_list, a_flat_list, bias_2d, descs)."""
    B, I = x.shape
    out_half = half_params[0][2].shape[-1]
    O_total = 2 * out_half

    if block_b is None:
        # 128-row batch tiles for real workloads; small batches round up to the
        # f32 sublane multiple (8) so the block stays (8,128)-legal.
        block_b = 128 if B >= 128 else _round_up(max(B, 1), 8)
    Bp = _round_up(B, block_b)
    x_p = x if Bp == B else jnp.pad(x, ((0, Bp - B), (0, 0)))
    grid = (Bp // block_b,)

    in_arrays = [x_p]
    in_specs = [pl.BlockSpec((block_b, I), lambda i: (i, 0))]
    half_descs = []
    flops = 0
    weight_bytes = 0
    for (w1t_list, a_flat_list, bias_2d, descs) in half_params:
        half_descs.append(tuple(descs))
        for w1t in w1t_list:                       # [I1, O1], full block, fetched once
            in_arrays.append(w1t)
            in_specs.append(pl.BlockSpec(w1t.shape, lambda i: (0, 0)))
            weight_bytes += w1t.size * w1t.dtype.itemsize
        for a_flat in a_flat_list:                 # tiny factor -> SMEM scalars
            in_arrays.append(a_flat)
            in_specs.append(pl.BlockSpec(memory_space=pltpu.MemorySpace.SMEM))
            weight_bytes += a_flat.size * a_flat.dtype.itemsize
        in_arrays.append(bias_2d)                  # [1, O_half]
        in_specs.append(pl.BlockSpec(bias_2d.shape, lambda i: (0, 0)))
        weight_bytes += bias_2d.size * bias_2d.dtype.itemsize
        for (I1, I2, O1, O2) in descs:
            flops += 2 * Bp * (I1 * I2 * O1 + I2 * O1 * O2)

    bytes_accessed = (x_p.size * x_p.dtype.itemsize
                      + weight_bytes
                      + Bp * O_total * x.dtype.itemsize)

    out = pl.pallas_call(
        _make_ffn_mkm_kernel(tuple(half_descs)),
        out_shape=jax.ShapeDtypeStruct((Bp, O_total), x.dtype),
        grid=grid,
        in_specs=in_specs,
        out_specs=pl.BlockSpec((block_b, O_total), lambda i: (i, 0)),
        compiler_params=pltpu.CompilerParams(
            dimension_semantics=("parallel",)),
        cost_estimate=pl.CostEstimate(
            flops=flops, transcendentals=0, bytes_accessed=bytes_accessed),
    )(*in_arrays)
    return out[:B]


# --------------------------- Module-equivalent --------------------------------
class FeedForwardProjMKMPallas:
    """JAX/Pallas re-implementation of FeedForwardProjMKM (mkm_type='multi')."""

    def __init__(self, in_features, out_features, factors, bias=True,
                 key=jax.random.PRNGKey(0), dtype=jnp.float32):
        out_half = out_features // 2
        for f1, f2 in factors:
            assert in_features % f1 == 0
            assert out_half % f2 == 0
        self.in_features = in_features
        self.out_features = out_features
        self.out_half = out_half
        self.factors = [tuple(f) for f in factors]

        n = len(self.factors)
        keys = jax.random.split(key, 2 * (2 * n + 1))
        k_iter = iter(keys)

        def make_half():
            exps = []
            for (f1, f2) in self.factors:
                I1, I2 = in_features // f1, f1
                O1, O2 = out_half // f2, f2
                # kaiming_uniform_(a=sqrt(5)) on [fan_out, fan_in] -> U(+-1/sqrt(fan_in))
                b1 = 1.0 / math.sqrt(I1)
                w_O1I1 = jax.random.uniform(next(k_iter), (O1, I1),
                                            minval=-b1, maxval=b1, dtype=dtype)
                b2 = 1.0 / math.sqrt(I2)
                w_O2I2 = jax.random.uniform(next(k_iter), (O2, I2),
                                            minval=-b2, maxval=b2, dtype=dtype)
                exps.append((w_O1I1, w_O2I2))
            k_b = next(k_iter)
            if bias:
                bb = 1.0 / math.sqrt(in_features)
                b = jax.random.uniform(k_b, (out_half,), minval=-bb, maxval=bb,
                                       dtype=dtype)
            else:
                b = jnp.zeros((out_half,), dtype=dtype)
            return exps, b

        self.exps_w1, self.bias1 = make_half()
        self.exps_w2, self.bias2 = make_half()

        # Hoisted weight prep (transpose / flatten) -- done once, not per call.
        self._half_params = (self._prep_half(self.exps_w1, self.bias1),
                             self._prep_half(self.exps_w2, self.bias2))

    @staticmethod
    def _prep_half(exps, bias_vec):
        w1t_list, a_flat_list, descs = [], [], []
        for (w_O1I1, w_O2I2) in exps:
            O1, I1 = w_O1I1.shape
            O2, I2 = w_O2I2.shape
            w1t_list.append(jnp.transpose(w_O1I1))          # [I1, O1]  (K-major RHS)
            a_flat_list.append(jnp.reshape(w_O2I2, (-1,)))   # [O2*I2]   row-major
            descs.append((I1, I2, O1, O2))
        bias_2d = jnp.reshape(bias_vec, (1, -1))
        return (w1t_list, a_flat_list, bias_2d, tuple(descs))

    def __call__(self, x):
        return ffn_mkm_forward(x, self._half_params)

    def reference(self, x):
        # Pure-JAX reference mirroring the PyTorch forward (kron-sum + matmul).
        outs = []
        for exps, bias in ((self.exps_w1, self.bias1), (self.exps_w2, self.bias2)):
            W = None
            for w_O1I1, w_O2I2 in exps:
                k = jnp.kron(w_O2I2, w_O1I1)                 # [O_half, I]
                W = k if W is None else W + k
            outs.append(x @ W.T + bias)
        return jnp.concatenate(outs, axis=-1)


# --------------------------------- main ---------------------------------------
if __name__ == "__main__":
    key = jax.random.PRNGKey(0)
    k_x, k_params = jax.random.split(key)

    B = 8
    in_features = 256
    out_features = 256                 # each MKM half produces 128 features
    factors = [[4, 8], [2, 4]]         # (f1, f2): in % f1 == 0, (out//2) % f2 == 0

    layer = FeedForwardProjMKMPallas(in_features, out_features, factors,
                                     bias=True, key=k_params)
    x = jax.random.normal(k_x, (B, in_features), dtype=jnp.float32)

    out = jax.block_until_ready(layer(x))
    ref = layer.reference(x)

    assert out.shape == (B, 2 * (out_features // 2))
    assert jnp.allclose(out, ref, atol=1e-4, rtol=1e-4), \
        float(jnp.max(jnp.abs(out - ref)))

    print("KERNEL_OK")
</pallas_src>

<mosaic_0001>
module attributes {stable_mosaic.version = 11 : i64} {
  func.func @kernel(%arg0: i32, %arg1: memref<8x256xf32, #tpu.memory_space<vmem>>, %arg2: memref<64x16xf32, #tpu.memory_space<vmem>>, %arg3: memref<128x32xf32, #tpu.memory_space<vmem>>, %arg4: memref<32xf32, #tpu.memory_space<smem>>, %arg5: memref<8xf32, #tpu.memory_space<smem>>, %arg6: memref<1x128xf32, #tpu.memory_space<vmem>>, %arg7: memref<64x16xf32, #tpu.memory_space<vmem>>, %arg8: memref<128x32xf32, #tpu.memory_space<vmem>>, %arg9: memref<32xf32, #tpu.memory_space<smem>>, %arg10: memref<8xf32, #tpu.memory_space<smem>>, %arg11: memref<1x128xf32, #tpu.memory_space<vmem>>, %arg12: memref<8x256xf32, #tpu.memory_space<vmem>>) attributes {dimension_semantics = [#tpu.dimension_semantics<parallel>], iteration_bounds = array<i64: 1>, scalar_prefetch = 0 : i64, scratch_operands = 0 : i64, tpu.core_type = #tpu.core_type<tc>, window_params = [{transform_indices = @transform_0, window_bounds = array<i64: 8, 256>}, {pipeline_mode = #tpu.pipeline_mode<synchronous>, transform_indices = @transform_1, window_bounds = array<i64: 64, 16>}, {pipeline_mode = #tpu.pipeline_mode<synchronous>, transform_indices = @transform_2, window_bounds = array<i64: 128, 32>}, {transform_indices = @transform_3, window_bounds = array<i64: 32>}, {transform_indices = @transform_4, window_bounds = array<i64: 8>}, {pipeline_mode = #tpu.pipeline_mode<synchronous>, transform_indices = @transform_5, window_bounds = array<i64: 1, 128>}, {pipeline_mode = #tpu.pipeline_mode<synchronous>, transform_indices = @transform_6, window_bounds = array<i64: 64, 16>}, {pipeline_mode = #tpu.pipeline_mode<synchronous>, transform_indices = @transform_7, window_bounds = array<i64: 128, 32>}, {transform_indices = @transform_8, window_bounds = array<i64: 32>}, {transform_indices = @transform_9, window_bounds = array<i64: 8>}, {pipeline_mode = #tpu.pipeline_mode<synchronous>, transform_indices = @transform_10, window_bounds = array<i64: 1, 128>}, {transform_indices = @transform_11, window_bounds = array<i64: 8, 256>}]} {
    %c0 = arith.constant 0 : index
    %c0_0 = arith.constant 0 : index
    %0 = vector.load %arg1[%c0, %c0_0] : memref<8x256xf32, #tpu.memory_space<vmem>>, vector<8x256xf32>
    %c0_1 = arith.constant 0 : index
    %c0_2 = arith.constant 0 : index
    %1 = vector.load %arg2[%c0_1, %c0_2] : memref<64x16xf32, #tpu.memory_space<vmem>>, vector<64x16xf32>
    %2 = vector.extract_strided_slice %0 {offsets = [0, 0], sizes = [8, 64], strides = [1, 1]} : vector<8x256xf32> to vector<8x64xf32>
    %cst = arith.constant dense<0.000000e+00> : vector<8x16xf32>
    %3 = tpu.matmul %2, %1, %cst {dimension_numbers = #tpu.dot_dimension_numbers<[1], [0], [0], [1], [0, 0, 1, 1], [], []>} : vector<8x64xf32>, vector<64x16xf32>, vector<8x16xf32> -> vector<8x16xf32>
    %c0_3 = arith.constant 0 : index
    %4 = memref.load %arg4[%c0_3] : memref<32xf32, #tpu.memory_space<smem>>
    %5 = vector.broadcast %4 : f32 to vector<8x16xf32>
    %6 = arith.mulf %5, %3 : vector<8x16xf32>
    %c4 = arith.constant 4 : index
    %7 = memref.load %arg4[%c4] : memref<32xf32, #tpu.memory_space<smem>>
    %8 = vector.broadcast %7 : f32 to vector<8x16xf32>
    %9 = arith.mulf %8, %3 : vector<8x16xf32>
    %c8 = arith.constant 8 : index
    %10 = memref.load %arg4[%c8] : memref<32xf32, #tpu.memory_space<smem>>
    %11 = vector.broadcast %10 : f32 to vector<8x16xf32>
    %12 = arith.mulf %11, %3 : vector<8x16xf32>
    %c12 = arith.constant 12 : index
    %13 = memref.load %arg4[%c12] : memref<32xf32, #tpu.memory_space<smem>>
    %14 = vector.broadcast %13 : f32 to vector<8x16xf32>
    %15 = arith.mulf %14, %3 : vector<8x16xf32>
    %c16 = arith.constant 16 : index
    %16 = memref.load %arg4[%c16] : memref<32xf32, #tpu.memory_space<smem>>
    %17 = vector.broadcast %16 : f32 to vector<8x16xf32>
    %18 = arith.mulf %17, %3 : vector<8x16xf32>
    %c20 = arith.constant 20 : index
    %19 = memref.load %arg4[%c20] : memref<32xf32, #tpu.memory_space<smem>>
    %20 = vector.broadcast %19 : f32 to vector<8x16xf32>
    %21 = arith.mulf %20, %3 : vector<8x16xf32>
    %c24 = arith.constant 24 : index
    %22 = memref.load %arg4[%c24] : memref<32xf32, #tpu.memory_space<smem>>
    %23 = vector.broadcast %22 : f32 to vector<8x16xf32>
    %24 = arith.mulf %23, %3 : vector<8x16xf32>
    %c28 = arith.constant 28 : index
    %25 = memref.load %arg4[%c28] : memref<32xf32, #tpu.memory_space<smem>>
    %26 = vector.broadcast %25 : f32 to vector<8x16xf32>
    %27 = arith.mulf %26, %3 : vector<8x16xf32>
    %28 = vector.extract_strided_slice %0 {offsets = [0, 64], sizes = [8, 64], strides = [1, 1]} : vector<8x256xf32> to vector<8x64xf32>
    %cst_4 = arith.constant dense<0.000000e+00> : vector<8x16xf32>
    %29 = tpu.matmul %28, %1, %cst_4 {dimension_numbers = #tpu.dot_dimension_numbers<[1], [0], [0], [1], [0, 0, 1, 1], [], []>} : vector<8x64xf32>, vector<64x16xf32>, vector<8x16xf32> -> vector<8x16xf32>
    %c1 = arith.constant 1 : index
    %30 = memref.load %arg4[%c1] : memref<32xf32, #tpu.memory_space<smem>>
    %31 = vector.broadcast %30 : f32 to vector<8x16xf32>
    %32 = arith.mulf %31, %29 : vector<8x16xf32>
    %33 = arith.addf %6, %32 : vector<8x16xf32>
    %c5 = arith.constant 5 : index
    %34 = memref.load %arg4[%c5] : memref<32xf32, #tpu.memory_space<smem>>
    %35 = vector.broadcast %34 : f32 to vector<8x16xf32>
    %36 = arith.mulf %35, %29 : vector<8x16xf32>
    %37 = arith.addf %9, %36 : vector<8x16xf32>
    %c9 = arith.constant 9 : index
    %38 = memref.load %arg4[%c9] : memref<32xf32, #tpu.memory_space<smem>>
    %39 = vector.broadcast %38 : f32 to vector<8x16xf32>
    %40 = arith.mulf %39, %29 : vector<8x16xf32>
    %41 = arith.addf %12, %40 : vector<8x16xf32>
    %c13 = arith.constant 13 : index
    %42 = memref.load %arg4[%c13] : memref<32xf32, #tpu.memory_space<smem>>
    %43 = vector.broadcast %42 : f32 to vector<8x16xf32>
    %44 = arith.mulf %43, %29 : vector<8x16xf32>
    %45 = arith.addf %15, %44 : vector<8x16xf32>
    %c17 = arith.constant 17 : index
    %46 = memref.load %arg4[%c17] : memref<32xf32, #tpu.memory_space<smem>>
    %47 = vector.broadcast %46 : f32 to vector<8x16xf32>
    %48 = arith.mulf %47, %29 : vector<8x16xf32>
    %49 = arith.addf %18, %48 : vector<8x16xf32>
    %c21 = arith.constant 21 : index
    %50 = memref.load %arg4[%c21] : memref<32xf32, #tpu.memory_space<smem>>
    %51 = vector.broadcast %50 : f32 to vector<8x16xf32>
    %52 = arith.mulf %51, %29 : vector<8x16xf32>
    %53 = arith.addf %21, %52 : vector<8x16xf32>
    %c25 = arith.constant 25 : index
    %54 = memref.load %arg4[%c25] : memref<32xf32, #tpu.memory_space<smem>>
    %55 = vector.broadcast %54 : f32 to vector<8x16xf32>
    %56 = arith.mulf %55, %29 : vector<8x16xf32>
    %57 = arith.addf %24, %56 : vector<8x16xf32>
    %c29 = arith.constant 29 : index
    %58 = memref.load %arg4[%c29] : memref<32xf32, #tpu.memory_space<smem>>
    %59 = vector.broadcast %58 : f32 to vector<8x16xf32>
    %60 = arith.mulf %59, %29 : vector<8x16xf32>
    %61 = arith.addf %27, %60 : vector<8x16xf32>
    %62 = vector.extract_strided_slice %0 {offsets = [0, 128], sizes = [8, 64], strides = [1, 1]} : vector<8x256xf32> to vector<8x64xf32>
    %cst_5 = arith.constant dense<0.000000e+00> : vector<8x16xf32>
    %63 = tpu.matmul %62, %1, %cst_5 {dimension_numbers = #tpu.dot_dimension_numbers<[1], [0], [0], [1], [0, 0, 1, 1], [], []>} : vector<8x64xf32>, vector<64x16xf32>, vector<8x16xf32> -> vector<8x16xf32>
    %c2 = arith.constant 2 : index
    %64 = memref.load %arg4[%c2] : memref<32xf32, #tpu.memory_space<smem>>
    %65 = vector.broadcast %64 : f32 to vector<8x16xf32>
    %66 = arith.mulf %65, %63 : vector<8x16xf32>
    %67 = arith.addf %33, %66 : vector<8x16xf32>
    %c6 = arith.constant 6 : index
    %68 = memref.load %arg4[%c6] : memref<32xf32, #tpu.memory_space<smem>>
    %69 = vector.broadcast %68 : f32 to vector<8x16xf32>
    %70 = arith.mulf %69, %63 : vector<8x16xf32>
    %71 = arith.addf %37, %70 : vector<8x16xf32>
    %c10 = arith.constant 10 : index
    %72 = memref.load %arg4[%c10] : memref<32xf32, #tpu.memory_space<smem>>
    %73 = vector.broadcast %72 : f32 to vector<8x16xf32>
    %74 = arith.mulf %73, %63 : vector<8x16xf32>
    %75 = arith.addf %41, %74 : vector<8x16xf32>
    %c14 = arith.constant 14 : index
    %76 = memref.load %arg4[%c14] : memref<32xf32, #tpu.memory_space<smem>>
    %77 = vector.broadcast %76 : f32 to vector<8x16xf32>
    %78 = arith.mulf %77, %63 : vector<8x16xf32>
    %79 = arith.addf %45, %78 : vector<8x16xf32>
    %c18 = arith.constant 18 : index
    %80 = memref.load %arg4[%c18] : memref<32xf32, #tpu.memory_space<smem>>
    %81 = vector.broadcast %80 : f32 to vector<8x16xf32>
    %82 = arith.mulf %81, %63 : vector<8x16xf32>
    %83 = arith.addf %49, %82 : vector<8x16xf32>
    %c22 = arith.constant 22 : index
    %84 = memref.load %arg4[%c22] : memref<32xf32, #tpu.memory_space<smem>>
    %85 = vector.broadcast %84 : f32 to vector<8x16xf32>
    %86 = arith.mulf %85, %63 : vector<8x16xf32>
    %87 = arith.addf %53, %86 : vector<8x16xf32>
    %c26 = arith.constant 26 : index
    %88 = memref.load %arg4[%c26] : memref<32xf32, #tpu.memory_space<smem>>
    %89 = vector.broadcast %88 : f32 to vector<8x16xf32>
    %90 = arith.mulf %89, %63 : vector<8x16xf32>
    %91 = arith.addf %57, %90 : vector<8x16xf32>
    %c30 = arith.constant 30 : index
    %92 = memref.load %arg4[%c30] : memref<32xf32, #tpu.memory_space<smem>>
    %93 = vector.broadcast %92 : f32 to vector<8x16xf32>
    %94 = arith.mulf %93, %63 : vector<8x16xf32>
    %95 = arith.addf %61, %94 : vector<8x16xf32>
    %96 = vector.extract_strided_slice %0 {offsets = [0, 192], sizes = [8, 64], strides = [1, 1]} : vector<8x256xf32> to vector<8x64xf32>
    %cst_6 = arith.constant dense<0.000000e+00> : vector<8x16xf32>
    %97 = tpu.matmul %96, %1, %cst_6 {dimension_numbers = #tpu.dot_dimension_numbers<[1], [0], [0], [1], [0, 0, 1, 1], [], []>} : vector<8x64xf32>, vector<64x16xf32>, vector<8x16xf32> -> vector<8x16xf32>
    %c3 = arith.constant 3 : index
    %98 = memref.load %arg4[%c3] : memref<32xf32, #tpu.memory_space<smem>>
    %99 = vector.broadcast %98 : f32 to vector<8x16xf32>
    %100 = arith.mulf %99, %97 : vector<8x16xf32>
    %101 = arith.addf %67, %100 : vector<8x16xf32>
    %c7 = arith.constant 7 : index
    %102 = memref.load %arg4[%c7] : memref<32xf32, #tpu.memory_space<smem>>
    %103 = vector.broadcast %102 : f32 to vector<8x16xf32>
    %104 = arith.mulf %103, %97 : vector<8x16xf32>
    %105 = arith.addf %71, %104 : vector<8x16xf32>
    %c11 = arith.constant 11 : index
    %106 = memref.load %arg4[%c11] : memref<32xf32, #tpu.memory_space<smem>>
    %107 = vector.broadcast %106 : f32 to vector<8x16xf32>
    %108 = arith.mulf %107, %97 : vector<8x16xf32>
    %109 = arith.addf %75, %108 : vector<8x16xf32>
    %c15 = arith.constant 15 : index
    %110 = memref.load %arg4[%c15] : memref<32xf32, #tpu.memory_space<smem>>
    %111 = vector.broadcast %110 : f32 to vector<8x16xf32>
    %112 = arith.mulf %111, %97 : vector<8x16xf32>
    %113 = arith.addf %79, %112 : vector<8x16xf32>
    %c19 = arith.constant 19 : index
    %114 = memref.load %arg4[%c19] : memref<32xf32, #tpu.memory_space<smem>>
    %115 = vector.broadcast %114 : f32 to vector<8x16xf32>
    %116 = arith.mulf %115, %97 : vector<8x16xf32>
    %117 = arith.addf %83, %116 : vector<8x16xf32>
    %c23 = arith.constant 23 : index
    %118 = memref.load %arg4[%c23] : memref<32xf32, #tpu.memory_space<smem>>
    %119 = vector.broadcast %118 : f32 to vector<8x16xf32>
    %120 = arith.mulf %119, %97 : vector<8x16xf32>
    %121 = arith.addf %87, %120 : vector<8x16xf32>
    %c27 = arith.constant 27 : index
    %122 = memref.load %arg4[%c27] : memref<32xf32, #tpu.memory_space<smem>>
    %123 = vector.broadcast %122 : f32 to vector<8x16xf32>
    %124 = arith.mulf %123, %97 : vector<8x16xf32>
    %125 = arith.addf %91, %124 : vector<8x16xf32>
    %c31 = arith.constant 31 : index
    %126 = memref.load %arg4[%c31] : memref<32xf32, #tpu.memory_space<smem>>
    %127 = vector.broadcast %126 : f32 to vector<8x16xf32>
    %128 = arith.mulf %127, %97 : vector<8x16xf32>
    %129 = arith.addf %95, %128 : vector<8x16xf32>
    %130 = tpu.concatenate %101, %105, %109, %113, %117, %121, %125, %129 in 1 : vector<8x16xf32>, vector<8x16xf32>, vector<8x16xf32>, vector<8x16xf32>, vector<8x16xf32>, vector<8x16xf32>, vector<8x16xf32>, vector<8x16xf32> -> vector<8x128xf32>
    %c0_7 = arith.constant 0 : index
    %c0_8 = arith.constant 0 : index
    %131 = vector.load %arg3[%c0_7, %c0_8] : memref<128x32xf32, #tpu.memory_space<vmem>>, vector<128x32xf32>
    %132 = vector.extract_strided_slice %0 {offsets = [0, 0], sizes = [8, 128], strides = [1, 1]} : vector<8x256xf32> to vector<8x128xf32>
    %cst_9 = arith.constant dense<0.000000e+00> : vector<8x32xf32>
    %133 = tpu.matmul %132, %131, %cst_9 {dimension_numbers = #tpu.dot_dimension_numbers<[1], [0], [0], [1], [0, 0, 1, 1], [], []>} : vector<8x128xf32>, vector<128x32xf32>, vector<8x32xf32> -> vector<8x32xf32>
    %c0_10 = arith.constant 0 : index
    %134 = memref.load %arg5[%c0_10] : memref<8xf32, #tpu.memory_space<smem>>
    %135 = vector.broadcast %134 : f32 to vector<8x32xf32>
    %136 = arith.mulf %135, %133 : vector<8x32xf32>
    %c2_11 = arith.constant 2 : index
    %137 = memref.load %arg5[%c2_11] : memref<8xf32, #tpu.memory_space<smem>>
    %138 = vector.broadcast %137 : f32 to vector<8x32xf32>
    %139 = arith.mulf %138, %133 : vector<8x32xf32>
    %c4_12 = arith.constant 4 : index
    %140 = memref.load %arg5[%c4_12] : memref<8xf32, #tpu.memory_space<smem>>
    %141 = vector.broadcast %140 : f32 to vector<8x32xf32>
    %142 = arith.mulf %141, %133 : vector<8x32xf32>
    %c6_13 = arith.constant 6 : index
    %143 = memref.load %arg5[%c6_13] : memref<8xf32, #tpu.memory_space<smem>>
    %144 = vector.broadcast %143 : f32 to vector<8x32xf32>
    %145 = arith.mulf %144, %133 : vector<8x32xf32>
    %146 = vector.extract_strided_slice %0 {offsets = [0, 128], sizes = [8, 128], strides = [1, 1]} : vector<8x256xf32> to vector<8x128xf32>
    %cst_14 = arith.constant dense<0.000000e+00> : vector<8x32xf32>
    %147 = tpu.matmul %146, %131, %cst_14 {dimension_numbers = #tpu.dot_dimension_numbers<[1], [0], [0], [1], [0, 0, 1, 1], [], []>} : vector<8x128xf32>, vector<128x32xf32>, vector<8x32xf32> -> vector<8x32xf32>
    %c1_15 = arith.constant 1 : index
    %148 = memref.load %arg5[%c1_15] : memref<8xf32, #tpu.memory_space<smem>>
    %149 = vector.broadcast %148 : f32 to vector<8x32xf32>
    %150 = arith.mulf %149, %147 : vector<8x32xf32>
    %151 = arith.addf %136, %150 : vector<8x32xf32>
    %c3_16 = arith.constant 3 : index
    %152 = memref.load %arg5[%c3_16] : memref<8xf32, #tpu.memory_space<smem>>
    %153 = vector.broadcast %152 : f32 to vector<8x32xf32>
    %154 = arith.mulf %153, %147 : vector<8x32xf32>
    %155 = arith.addf %139, %154 : vector<8x32xf32>
    %c5_17 = arith.constant 5 : index
    %156 = memref.load %arg5[%c5_17] : memref<8xf32, #tpu.memory_space<smem>>
    %157 = vector.broadcast %156 : f32 to vector<8x32xf32>
    %158 = arith.mulf %157, %147 : vector<8x32xf32>
    %159 = arith.addf %142, %158 : vector<8x32xf32>
    %c7_18 = arith.constant 7 : index
    %160 = memref.load %arg5[%c7_18] : memref<8xf32, #tpu.memory_space<smem>>
    %161 = vector.broadcast %160 : f32 to vector<8x32xf32>
    %162 = arith.mulf %161, %147 : vector<8x32xf32>
    %163 = arith.addf %145, %162 : vector<8x32xf32>
    %164 = tpu.concatenate %151, %155, %159, %163 in 1 : vector<8x32xf32>, vector<8x32xf32>, vector<8x32xf32>, vector<8x32xf32> -> vector<8x128xf32>
    %165 = arith.addf %130, %164 : vector<8x128xf32>
    %c0_19 = arith.constant 0 : index
    %c0_20 = arith.constant 0 : index
    %166 = vector.load %arg6[%c0_19, %c0_20] : memref<1x128xf32, #tpu.memory_space<vmem>>, vector<1x128xf32>
    %167 = vector.broadcast %166 : vector<1x128xf32> to vector<8x128xf32>
    %168 = arith.addf %165, %167 : vector<8x128xf32>
    %c0_21 = arith.constant 0 : index
    %c0_22 = arith.constant 0 : index
    %169 = vector.load %arg7[%c0_21, %c0_22] : memref<64x16xf32, #tpu.memory_space<vmem>>, vector<64x16xf32>
    %170 = vector.extract_strided_slice %0 {offsets = [0, 0], sizes = [8, 64], strides = [1, 1]} : vector<8x256xf32> to vector<8x64xf32>
    %cst_23 = arith.constant dense<0.000000e+00> : vector<8x16xf32>
    %171 = tpu.matmul %170, %169, %cst_23 {dimension_numbers = #tpu.dot_dimension_numbers<[1], [0], [0], [1], [0, 0, 1, 1], [], []>} : vector<8x64xf32>, vector<64x16xf32>, vector<8x16xf32> -> vector<8x16xf32>
    %c0_24 = arith.constant 0 : index
    %172 = memref.load %arg9[%c0_24] : memref<32xf32, #tpu.memory_space<smem>>
    %173 = vector.broadcast %172 : f32 to vector<8x16xf32>
    %174 = arith.mulf %173, %171 : vector<8x16xf32>
    %c4_25 = arith.constant 4 : index
    %175 = memref.load %arg9[%c4_25] : memref<32xf32, #tpu.memory_space<smem>>
    %176 = vector.broadcast %175 : f32 to vector<8x16xf32>
    %177 = arith.mulf %176, %171 : vector<8x16xf32>
    %c8_26 = arith.constant 8 : index
    %178 = memref.load %arg9[%c8_26] : memref<32xf32, #tpu.memory_space<smem>>
    %179 = vector.broadcast %178 : f32 to vector<8x16xf32>
    %180 = arith.mulf %179, %171 : vector<8x16xf32>
    %c12_27 = arith.constant 12 : index
    %181 = memref.load %arg9[%c12_27] : memref<32xf32, #tpu.memory_space<smem>>
    %182 = vector.broadcast %181 : f32 to vector<8x16xf32>
    %183 = arith.mulf %182, %171 : vector<8x16xf32>
    %c16_28 = arith.constant 16 : index
    %184 = memref.load %arg9[%c16_28] : memref<32xf32, #tpu.memory_space<smem>>
    %185 = vector.broadcast %184 : f32 to vector<8x16xf32>
    %186 = arith.mulf %185, %171 : vector<8x16xf32>
    %c20_29 = arith.constant 20 : index
    %187 = memref.load %arg9[%c20_29] : memref<32xf32, #tpu.memory_space<smem>>
    %188 = vector.broadcast %187 : f32 to vector<8x16xf32>
    %189 = arith.mulf %188, %171 : vector<8x16xf32>
    %c24_30 = arith.constant 24 : index
    %190 = memref.load %arg9[%c24_30] : memref<32xf32, #tpu.memory_space<smem>>
    %191 = vector.broadcast %190 : f32 to vector<8x16xf32>
    %192 = arith.mulf %191, %171 : vector<8x16xf32>
    %c28_31 = arith.constant 28 : index
    %193 = memref.load %arg9[%c28_31] : memref<32xf32, #tpu.memory_space<smem>>
    %194 = vector.broadcast %193 : f32 to vector<8x16xf32>
    %195 = arith.mulf %194, %171 : vector<8x16xf32>
    %196 = vector.extract_strided_slice %0 {offsets = [0, 64], sizes = [8, 64], strides = [1, 1]} : vector<8x256xf32> to vector<8x64xf32>
    %cst_32 = arith.constant dense<0.000000e+00> : vector<8x16xf32>
    %197 = tpu.matmul %196, %169, %cst_32 {dimension_numbers = #tpu.dot_dimension_numbers<[1], [0], [0], [1], [0, 0, 1, 1], [], []>} : vector<8x64xf32>, vector<64x16xf32>, vector<8x16xf32> -> vector<8x16xf32>
    %c1_33 = arith.constant 1 : index
    %198 = memref.load %arg9[%c1_33] : memref<32xf32, #tpu.memory_space<smem>>
    %199 = vector.broadcast %198 : f32 to vector<8x16xf32>
    %200 = arith.mulf %199, %197 : vector<8x16xf32>
    %201 = arith.addf %174, %200 : vector<8x16xf32>
    %c5_34 = arith.constant 5 : index
    %202 = memref.load %arg9[%c5_34] : memref<32xf32, #tpu.memory_space<smem>>
    %203 = vector.broadcast %202 : f32 to vector<8x16xf32>
    %204 = arith.mulf %203, %197 : vector<8x16xf32>
    %205 = arith.addf %177, %204 : vector<8x16xf32>
    %c9_35 = arith.constant 9 : index
    %206 = memref.load %arg9[%c9_35] : memref<32xf32, #tpu.memory_space<smem>>
    %207 = vector.broadcast %206 : f32 to vector<8x16xf32>
    %208 = arith.mulf %207, %197 : vector<8x16xf32>
    %209 = arith.addf %180, %208 : vector<8x16xf32>
    %c13_36 = arith.constant 13 : index
    %210 = memref.load %arg9[%c13_36] : memref<32xf32, #tpu.memory_space<smem>>
    %211 = vector.broadcast %210 : f32 to vector<8x16xf32>
    %212 = arith.mulf %211, %197 : vector<8x16xf32>
    %213 = arith.addf %183, %212 : vector<8x16xf32>
    %c17_37 = arith.constant 17 : index
    %214 = memref.load %arg9[%c17_37] : memref<32xf32, #tpu.memory_space<smem>>
    %215 = vector.broadcast %214 : f32 to vector<8x16xf32>
    %216 = arith.mulf %215, %197 : vector<8x16xf32>
    %217 = arith.addf %186, %216 : vector<8x16xf32>
    %c21_38 = arith.constant 21 : index
    %218 = memref.load %arg9[%c21_38] : memref<32xf32, #tpu.memory_space<smem>>
    %219 = vector.broadcast %218 : f32 to vector<8x16xf32>
    %220 = arith.mulf %219, %197 : vector<8x16xf32>
    %221 = arith.addf %189, %220 : vector<8x16xf32>
    %c25_39 = arith.constant 25 : index
    %222 = memref.load %arg9[%c25_39] : memref<32xf32, #tpu.memory_space<smem>>
    %223 = vector.broadcast %222 : f32 to vector<8x16xf32>
    %224 = arith.mulf %223, %197 : vector<8x16xf32>
    %225 = arith.addf %192, %224 : vector<8x16xf32>
    %c29_40 = arith.constant 29 : index
    %226 = memref.load %arg9[%c29_40] : memref<32xf32, #tpu.memory_space<smem>>
    %227 = vector.broadcast %226 : f32 to vector<8x16xf32>
    %228 = arith.mulf %227, %197 : vector<8x16xf32>
    %229 = arith.addf %195, %228 : vector<8x16xf32>
    %230 = vector.extract_strided_slice %0 {offsets = [0, 128], sizes = [8, 64], strides = [1, 1]} : vector<8x256xf32> to vector<8x64xf32>
    %cst_41 = arith.constant dense<0.000000e+00> : vector<8x16xf32>
    %231 = tpu.matmul %230, %169, %cst_41 {dimension_numbers = #tpu.dot_dimension_numbers<[1], [0], [0], [1], [0, 0, 1, 1], [], []>} : vector<8x64xf32>, vector<64x16xf32>, vector<8x16xf32> -> vector<8x16xf32>
    %c2_42 = arith.constant 2 : index
    %232 = memref.load %arg9[%c2_42] : memref<32xf32, #tpu.memory_space<smem>>
    %233 = vector.broadcast %232 : f32 to vector<8x16xf32>
    %234 = arith.mulf %233, %231 : vector<8x16xf32>
    %235 = arith.addf %201, %234 : vector<8x16xf32>
    %c6_43 = arith.constant 6 : index
    %236 = memref.load %arg9[%c6_43] : memref<32xf32, #tpu.memory_space<smem>>
    %237 = vector.broadcast %236 : f32 to vector<8x16xf32>
    %238 = arith.mulf %237, %231 : vector<8x16xf32>
    %239 = arith.addf %205, %238 : vector<8x16xf32>
    %c10_44 = arith.constant 10 : index
    %240 = memref.load %arg9[%c10_44] : memref<32xf32, #tpu.memory_space<smem>>
    %241 = vector.broadcast %240 : f32 to vector<8x16xf32>
    %242 = arith.mulf %241, %231 : vector<8x16xf32>
    %243 = arith.addf %209, %242 : vector<8x16xf32>
    %c14_45 = arith.constant 14 : index
    %244 = memref.load %arg9[%c14_45] : memref<32xf32, #tpu.memory_space<smem>>
    %245 = vector.broadcast %244 : f32 to vector<8x16xf32>
    %246 = arith.mulf %245, %231 : vector<8x16xf32>
    %247 = arith.addf %213, %246 : vector<8x16xf32>
    %c18_46 = arith.constant 18 : index
    %248 = memref.load %arg9[%c18_46] : memref<32xf32, #tpu.memory_space<smem>>
    %249 = vector.broadcast %248 : f32 to vector<8x16xf32>
    %250 = arith.mulf %249, %231 : vector<8x16xf32>
    %251 = arith.addf %217, %250 : vector<8x16xf32>
    %c22_47 = arith.constant 22 : index
    %252 = memref.load %arg9[%c22_47] : memref<32xf32, #tpu.memory_space<smem>>
    %253 = vector.broadcast %252 : f32 to vector<8x16xf32>
    %254 = arith.mulf %253, %231 : vector<8x16xf32>
    %255 = arith.addf %221, %254 : vector<8x16xf32>
    %c26_48 = arith.constant 26 : index
    %256 = memref.load %arg9[%c26_48] : memref<32xf32, #tpu.memory_space<smem>>
    %257 = vector.broadcast %256 : f32 to vector<8x16xf32>
    %258 = arith.mulf %257, %231 : vector<8x16xf32>
    %259 = arith.addf %225, %258 : vector<8x16xf32>
    %c30_49 = arith.constant 30 : index
    %260 = memref.load %arg9[%c30_49] : memref<32xf32, #tpu.memory_space<smem>>
    %261 = vector.broadcast %260 : f32 to vector<8x16xf32>
    %262 = arith.mulf %261, %231 : vector<8x16xf32>
    %263 = arith.addf %229, %262 : vector<8x16xf32>
    %264 = vector.extract_strided_slice %0 {offsets = [0, 192], sizes = [8, 64], strides = [1, 1]} : vector<8x256xf32> to vector<8x64xf32>
    %cst_50 = arith.constant dense<0.000000e+00> : vector<8x16xf32>
    %265 = tpu.matmul %264, %169, %cst_50 {dimension_numbers = #tpu.dot_dimension_numbers<[1], [0], [0], [1], [0, 0, 1, 1], [], []>} : vector<8x64xf32>, vector<64x16xf32>, vector<8x16xf32> -> vector<8x16xf32>
    %c3_51 = arith.constant 3 : index
    %266 = memref.load %arg9[%c3_51] : memref<32xf32, #tpu.memory_space<smem>>
    %267 = vector.broadcast %266 : f32 to vector<8x16xf32>
    %268 = arith.mulf %267, %265 : vector<8x16xf32>
    %269 = arith.addf %235, %268 : vector<8x16xf32>
    %c7_52 = arith.constant 7 : index
    %270 = memref.load %arg9[%c7_52] : memref<32xf32, #tpu.memory_space<smem>>
    %271 = vector.broadcast %270 : f32 to vector<8x16xf32>
    %272 = arith.mulf %271, %265 : vector<8x16xf32>
    %273 = arith.addf %239, %272 : vector<8x16xf32>
    %c11_53 = arith.constant 11 : index
    %274 = memref.load %arg9[%c11_53] : memref<32xf32, #tpu.memory_space<smem>>
    %275 = vector.broadcast %274 : f32 to vector<8x16xf32>
    %276 = arith.mulf %275, %265 : vector<8x16xf32>
    %277 = arith.addf %243, %276 : vector<8x16xf32>
    %c15_54 = arith.constant 15 : index
    %278 = memref.load %arg9[%c15_54] : memref<32xf32, #tpu.memory_space<smem>>
    %279 = vector.broadcast %278 : f32 to vector<8x16xf32>
    %280 = arith.mulf %279, %265 : vector<8x16xf32>
    %281 = arith.addf %247, %280 : vector<8x16xf32>
    %c19_55 = arith.constant 19 : index
    %282 = memref.load %arg9[%c19_55] : memref<32xf32, #tpu.memory_space<smem>>
    %283 = vector.broadcast %282 : f32 to vector<8x16xf32>
    %284 = arith.mulf %283, %265 : vector<8x16xf32>
    %285 = arith.addf %251, %284 : vector<8x16xf32>
    %c23_56 = arith.constant 23 : index
    %286 = memref.load %arg9[%c23_56] : memref<32xf32, #tpu.memory_space<smem>>
    %287 = vector.broadcast %286 : f32 to vector<8x16xf32>
    %288 = arith.mulf %287, %265 : vector<8x16xf32>
    %289 = arith.addf %255, %288 : vector<8x16xf32>
    %c27_57 = arith.constant 27 : index
    %290 = memref.load %arg9[%c27_57] : memref<32xf32, #tpu.memory_space<smem>>
    %291 = vector.broadcast %290 : f32 to vector<8x16xf32>
    %292 = arith.mulf %291, %265 : vector<8x16xf32>
    %293 = arith.addf %259, %292 : vector<8x16xf32>
    %c31_58 = arith.constant 31 : index
    %294 = memref.load %arg9[%c31_58] : memref<32xf32, #tpu.memory_space<smem>>
    %295 = vector.broadcast %294 : f32 to vector<8x16xf32>
    %296 = arith.mulf %295, %265 : vector<8x16xf32>
    %297 = arith.addf %263, %296 : vector<8x16xf32>
    %298 = tpu.concatenate %269, %273, %277, %281, %285, %289, %293, %297 in 1 : vector<8x16xf32>, vector<8x16xf32>, vector<8x16xf32>, vector<8x16xf32>, vector<8x16xf32>, vector<8x16xf32>, vector<8x16xf32>, vector<8x16xf32> -> vector<8x128xf32>
    %c0_59 = arith.constant 0 : index
    %c0_60 = arith.constant 0 : index
    %299 = vector.load %arg8[%c0_59, %c0_60] : memref<128x32xf32, #tpu.memory_space<vmem>>, vector<128x32xf32>
    %300 = vector.extract_strided_slice %0 {offsets = [0, 0], sizes = [8, 128], strides = [1, 1]} : vector<8x256xf32> to vector<8x128xf32>
    %cst_61 = arith.constant dense<0.000000e+00> : vector<8x32xf32>
    %301 = tpu.matmul %300, %299, %cst_61 {dimension_numbers = #tpu.dot_dimension_numbers<[1], [0], [0], [1], [0, 0, 1, 1], [], []>} : vector<8x128xf32>, vector<128x32xf32>, vector<8x32xf32> -> vector<8x32xf32>
    %c0_62 = arith.constant 0 : index
    %302 = memref.load %arg10[%c0_62] : memref<8xf32, #tpu.memory_space<smem>>
    %303 = vector.broadcast %302 : f32 to vector<8x32xf32>
    %304 = arith.mulf %303, %301 : vector<8x32xf32>
    %c2_63 = arith.constant 2 : index
    %305 = memref.load %arg10[%c2_63] : memref<8xf32, #tpu.memory_space<smem>>
    %306 = vector.broadcast %305 : f32 to vector<8x32xf32>
    %307 = arith.mulf %306, %301 : vector<8x32xf32>
    %c4_64 = arith.constant 4 : index
    %308 = memref.load %arg10[%c4_64] : memref<8xf32, #tpu.memory_space<smem>>
    %309 = vector.broadcast %308 : f32 to vector<8x32xf32>
    %310 = arith.mulf %309, %301 : vector<8x32xf32>
    %c6_65 = arith.constant 6 : index
    %311 = memref.load %arg10[%c6_65] : memref<8xf32, #tpu.memory_space<smem>>
    %312 = vector.broadcast %311 : f32 to vector<8x32xf32>
    %313 = arith.mulf %312, %301 : vector<8x32xf32>
    %314 = vector.extract_strided_slice %0 {offsets = [0, 128], sizes = [8, 128], strides = [1, 1]} : vector<8x256xf32> to vector<8x128xf32>
    %cst_66 = arith.constant dense<0.000000e+00> : vector<8x32xf32>
    %315 = tpu.matmul %314, %299, %cst_66 {dimension_numbers = #tpu.dot_dimension_numbers<[1], [0], [0], [1], [0, 0, 1, 1], [], []>} : vector<8x128xf32>, vector<128x32xf32>, vector<8x32xf32> -> vector<8x32xf32>
    %c1_67 = arith.constant 1 : index
    %316 = memref.load %arg10[%c1_67] : memref<8xf32, #tpu.memory_space<smem>>
    %317 = vector.broadcast %316 : f32 to vector<8x32xf32>
    %318 = arith.mulf %317, %315 : vector<8x32xf32>
    %319 = arith.addf %304, %318 : vector<8x32xf32>
    %c3_68 = arith.constant 3 : index
    %320 = memref.load %arg10[%c3_68] : memref<8xf32, #tpu.memory_space<smem>>
    %321 = vector.broadcast %320 : f32 to vector<8x32xf32>
    %322 = arith.mulf %321, %315 : vector<8x32xf32>
    %323 = arith.addf %307, %322 : vector<8x32xf32>
    %c5_69 = arith.constant 5 : index
    %324 = memref.load %arg10[%c5_69] : memref<8xf32, #tpu.memory_space<smem>>
    %325 = vector.broadcast %324 : f32 to vector<8x32xf32>
    %326 = arith.mulf %325, %315 : vector<8x32xf32>
    %327 = arith.addf %310, %326 : vector<8x32xf32>
    %c7_70 = arith.constant 7 : index
    %328 = memref.load %arg10[%c7_70] : memref<8xf32, #tpu.memory_space<smem>>
    %329 = vector.broadcast %328 : f32 to vector<8x32xf32>
    %330 = arith.mulf %329, %315 : vector<8x32xf32>
    %331 = arith.addf %313, %330 : vector<8x32xf32>
    %332 = tpu.concatenate %319, %323, %327, %331 in 1 : vector<8x32xf32>, vector<8x32xf32>, vector<8x32xf32>, vector<8x32xf32> -> vector<8x128xf32>
    %333 = arith.addf %298, %332 : vector<8x128xf32>
    %c0_71 = arith.constant 0 : index
    %c0_72 = arith.constant 0 : index
    %334 = vector.load %arg11[%c0_71, %c0_72] : memref<1x128xf32, #tpu.memory_space<vmem>>, vector<1x128xf32>
    %335 = vector.broadcast %334 : vector<1x128xf32> to vector<8x128xf32>
    %336 = arith.addf %333, %335 : vector<8x128xf32>
    %337 = tpu.concatenate %168, %336 in 1 : vector<8x128xf32>, vector<8x128xf32> -> vector<8x256xf32>
    %c0_73 = arith.constant 0 : index
    %c0_74 = arith.constant 0 : index
    %338 = vector.load %arg12[%c0_73, %c0_74] : memref<8x256xf32, #tpu.memory_space<vmem>>, vector<8x256xf32>
    tpu.vector_store %arg12[%c0_73, %c0_74], %337 {strides = array<i32>} : memref<8x256xf32, #tpu.memory_space<vmem>>, vector<8x256xf32>,
    return
  }
  func.func @transform_0(%arg0: i32) -> (i32, i32) {
    %c0_i32 = arith.constant 0 : i32
    %c0_i32_0 = arith.constant 0 : i32
    return %arg0, %c0_i32 : i32, i32
  }
  func.func @transform_1(%arg0: i32) -> (i32, i32) {
    %c0_i32 = arith.constant 0 : i32
    %c0_i32_0 = arith.constant 0 : i32
    %c0_i32_1 = arith.constant 0 : i32
    return %c0_i32, %c0_i32_0 : i32, i32
  }
  func.func @transform_2(%arg0: i32) -> (i32, i32) {
    %c0_i32 = arith.constant 0 : i32
    %c0_i32_0 = arith.constant 0 : i32
    %c0_i32_1 = arith.constant 0 : i32
    return %c0_i32, %c0_i32_0 : i32, i32
  }
  func.func @transform_3(%arg0: i32) -> i32 {
    %c0_i32 = arith.constant 0 : i32
    %c0_i32_0 = arith.constant 0 : i32
    return %c0_i32 : i32
  }
  func.func @transform_4(%arg0: i32) -> i32 {
    %c0_i32 = arith.constant 0 : i32
    %c0_i32_0 = arith.constant 0 : i32
    return %c0_i32 : i32
  }
  func.func @transform_5(%arg0: i32) -> (i32, i32) {
    %c0_i32 = arith.constant 0 : i32
    %c0_i32_0 = arith.constant 0 : i32
    %c0_i32_1 = arith.constant 0 : i32
    return %c0_i32, %c0_i32_0 : i32, i32
  }
  func.func @transform_6(%arg0: i32) -> (i32, i32) {
    %c0_i32 = arith.constant 0 : i32
    %c0_i32_0 = arith.constant 0 : i32
    %c0_i32_1 = arith.constant 0 : i32
    return %c0_i32, %c0_i32_0 : i32, i32
  }
  func.func @transform_7(%arg0: i32) -> (i32, i32) {
    %c0_i32 = arith.constant 0 : i32
    %c0_i32_0 = arith.constant 0 : i32
    %c0_i32_1 = arith.constant 0 : i32
    return %c0_i32, %c0_i32_0 : i32, i32
  }
  func.func @transform_8(%arg0: i32) -> i32 {
    %c0_i32 = arith.constant 0 : i32
    %c0_i32_0 = arith.constant 0 : i32
    return %c0_i32 : i32
  }
  func.func @transform_9(%arg0: i32) -> i32 {
    %c0_i32 = arith.constant 0 : i32
    %c0_i32_0 = arith.constant 0 : i32
    return %c0_i32 : i32
  }
  func.func @transform_10(%arg0: i32) -> (i32, i32) {
    %c0_i32 = arith.constant 0 : i32
    %c0_i32_0 = arith.constant 0 : i32
    %c0_i32_1 = arith.constant 0 : i32
    return %c0_i32, %c0_i32_0 : i32, i32
  }
  func.func @transform_11(%arg0: i32) -> (i32, i32) {
    %c0_i32 = arith.constant 0 : i32
    %c0_i32_0 = arith.constant 0 : i32
    return %arg0, %c0_i32 : i32, i32
  }
}

</mosaic_0001>

<llo_original>
// kernel: tpu_custom_call.1
$region0: #{tpu_custom_call.1}
  #allocation0 [shape = 'u32[]', space=smem, size = 0x4, offset = 0x4, fixed_abs, tag = 'smem constant byte address 0x4 - core index']
  #allocation1 [shape = 'u32[144,128]{1,0:T(1,128)}', space=vmem, size = 0x12000, scoped, tag = 'internal scratch']
  %s0 = inlined_call_operand.vmem [shape: f32[8,256], index: 0, kind: input, shape index: {}]
  %s1 = inlined_call_operand.vmem [shape: f32[64,16], index: 1, kind: input, shape index: {}]
  %s2 = inlined_call_operand.vmem [shape: f32[128,32], index: 2, kind: input, shape index: {}]
  %s3 = inlined_call_operand.vmem [shape: f32[32], index: 3, kind: input, shape index: {}]
  %s4 = inlined_call_operand.vmem [shape: f32[8], index: 4, kind: input, shape index: {}]
  %s5 = inlined_call_operand.vmem [shape: f32[1,128], index: 5, kind: input, shape index: {}]
  %s6 = inlined_call_operand.vmem [shape: f32[64,16], index: 6, kind: input, shape index: {}]
  %s7 = inlined_call_operand.vmem [shape: f32[128,32], index: 7, kind: input, shape index: {}]
  %s8 = inlined_call_operand.vmem [shape: f32[32], index: 8, kind: input, shape index: {}]
  %s9 = inlined_call_operand.vmem [shape: f32[8], index: 9, kind: input, shape index: {}]
  %s10 = inlined_call_operand.vmem [shape: f32[1,128], index: 10, kind: input, shape index: {}]
  %s11 = inlined_call_operand.hbm [shape: f32[8,256], index: 11, kind: output, shape index: {}]
  %s12 = sld [smem:[#allocation0]]
  $region70: #{tpu_custom_call.1} parent=0
    _
  %s14 = ssub.s32 1, %s12
  %s15 = scalar_select 0, %s14, %s12
  $region1: #{tpu_custom_call.1} parent=0
    #allocation2 [shape = 'u8[512]{0}', space=smem, size = 0x200, scoped, tag = 'input window, operand 3, single buffered']
    #allocation3 [shape = 's32[1]{0}', space=sflag, size = 0x4, scoped, tag = 'scoped memory for tpu_custom_call.1']
    #allocation4 [shape = 's32[1]{0}', space=sflag, size = 0x4, scoped, tag = 'scoped memory for tpu_custom_call.1']
    #allocation5 [shape = 'u8[512]{0}', space=smem, size = 0x200, scoped, tag = 'input window, operand 4, single buffered']
    #allocation6 [shape = 's32[1]{0}', space=sflag, size = 0x4, scoped, tag = 'scoped memory for tpu_custom_call.1']
    #allocation7 [shape = 'u8[512]{0}', space=smem, size = 0x200, scoped, tag = 'input window, operand 8, single buffered']
    #allocation8 [shape = 'u8[512]{0}', space=smem, size = 0x200, scoped, tag = 'input window, operand 9, single buffered']
    #allocation9 [shape = 's32[1]{0}', space=sflag, size = 0x4, scoped, tag = 'scoped memory for tpu_custom_call.1']
    #allocation10 [shape = 'u8[8192]{0}', space=vmem, size = 0x2000, scoped, tag = 'output window, operand 0, single buffered']
    %16 = vsyncpa [#allocation4], 0
    %17 = vsyncpa [#allocation6], 0
    %18 = vsyncpa [#allocation9], 0
    %19 = vsyncpa [#allocation3], 0
    // Predicated region
    $region2: #{tpu_custom_call.1} parent=1 // pred_check
      _
    $region3: #{tpu_custom_call.1} parent=1 // pred_check_branch
      %21 = sbr.rel (0) target = $region5
    $region4: #{tpu_custom_call.1} parent=1 // pred_region
      _
    $region5: #{tpu_custom_call.1} parent=1 // pred_fallthru
      _
    // Predicated region
    $region6: #{tpu_custom_call.1} parent=1 // pred_check
      _
    $region7: #{tpu_custom_call.1} parent=1 // pred_check_branch
      %23 = sbr.rel (0) target = $region9
    $region8: #{tpu_custom_call.1} parent=1 // pred_region
      _
    $region9: #{tpu_custom_call.1} parent=1 // pred_fallthru
      _
    // Predicated region
    $region10: #{tpu_custom_call.1} parent=1 // pred_check
      _
    $region11: #{tpu_custom_call.1} parent=1 // pred_check_branch
      %25 = sbr.rel (0) target = $region13
    $region12: #{tpu_custom_call.1} parent=1 // pred_region
      _
    $region13: #{tpu_custom_call.1} parent=1 // pred_fallthru
      _
    // Predicated region
    $region14: #{tpu_custom_call.1} parent=1 // pred_check
      _
    $region15: #{tpu_custom_call.1} parent=1 // pred_check_branch
      %27 = sbr.rel (0) target = $region17
    $region16: #{tpu_custom_call.1} parent=1 // pred_region
      %s29 = ssub.s32 16, 16
      %30 = vsyncadd [#allocation4], %s29
      %s32 = sshll.u32 %s3, 4
      %s33 = int_to_ptr.vmem [resolvable:$true] %s32
      %35 = dma.vmem_to_smem %s33, 16, [#allocation2], [#allocation4]
    $region17: #{tpu_custom_call.1} parent=1 // pred_fallthru
      _
    // Predicated region
    $region18: #{tpu_custom_call.1} parent=1 // pred_check
      _
    $region19: #{tpu_custom_call.1} parent=1 // pred_check_branch
      %37 = sbr.rel (0) target = $region21
    $region20: #{tpu_custom_call.1} parent=1 // pred_region
      %s39 = ssub.s32 16, 16
      %40 = vsyncadd [#allocation6], %s39
      %s42 = sshll.u32 %s4, 4
      %s43 = int_to_ptr.vmem [resolvable:$true] %s42
      %45 = dma.vmem_to_smem %s43, 16, [#allocation5], [#allocation6]
    $region21: #{tpu_custom_call.1} parent=1 // pred_fallthru
      _
    // Predicated region
    $region22: #{tpu_custom_call.1} parent=1 // pred_check
      _
    $region23: #{tpu_custom_call.1} parent=1 // pred_check_branch
      %47 = sbr.rel (0) target = $region25
    $region24: #{tpu_custom_call.1} parent=1 // pred_region
      _
    $region25: #{tpu_custom_call.1} parent=1 // pred_fallthru
      _
    // Predicated region
    $region26: #{tpu_custom_call.1} parent=1 // pred_check
      _
    $region27: #{tpu_custom_call.1} parent=1 // pred_check_branch
      %49 = sbr.rel (0) target = $region29
    $region28: #{tpu_custom_call.1} parent=1 // pred_region
      _
    $region29: #{tpu_custom_call.1} parent=1 // pred_fallthru
      _
    // Predicated region
    $region30: #{tpu_custom_call.1} parent=1 // pred_check
      _
    $region31: #{tpu_custom_call.1} parent=1 // pred_check_branch
      %51 = sbr.rel (0) target = $region33
    $region32: #{tpu_custom_call.1} parent=1 // pred_region
      _
    $region33: #{tpu_custom_call.1} parent=1 // pred_fallthru
      _
    // Predicated region
    $region34: #{tpu_custom_call.1} parent=1 // pred_check
      _
    $region35: #{tpu_custom_call.1} parent=1 // pred_check_branch
      %53 = sbr.rel (0) target = $region37
    $region36: #{tpu_custom_call.1} parent=1 // pred_region
      %s55 = ssub.s32 16, 16
      %56 = vsyncadd [#allocation6], %s55
      %s58 = sshll.u32 %s8, 4
      %s59 = int_to_ptr.vmem [resolvable:$true] %s58
      %61 = dma.vmem_to_smem %s59, 16, [#allocation7], [#allocation6]
    $region37: #{tpu_custom_call.1} parent=1 // pred_fallthru
      _
    // Predicated region
    $region38: #{tpu_custom_call.1} parent=1 // pred_check
      _
    $region39: #{tpu_custom_call.1} parent=1 // pred_check_branch
      %63 = sbr.rel (0) target = $region41
    $region40: #{tpu_custom_call.1} parent=1 // pred_region
      %s65 = ssub.s32 16, 16
      %66 = vsyncadd [#allocation9], %s65
      %s68 = sshll.u32 %s9, 4
      %s69 = int_to_ptr.vmem [resolvable:$true] %s68
      %71 = dma.vmem_to_smem %s69, 16, [#allocation8], [#allocation9]
    $region41: #{tpu_custom_call.1} parent=1 // pred_fallthru
      _
    // Predicated region
    $region42: #{tpu_custom_call.1} parent=1 // pred_check
      _
    $region43: #{tpu_custom_call.1} parent=1 // pred_check_branch
      %73 = sbr.rel (0) target = $region45
    $region44: #{tpu_custom_call.1} parent=1 // pred_region
      _
    $region45: #{tpu_custom_call.1} parent=1 // pred_fallthru
      _
    // Predicated region
    $region46: #{tpu_custom_call.1} parent=1 // pred_check
      _
    $region47: #{tpu_custom_call.1} parent=1 // pred_check_branch
      %75 = sbr.rel (0) target = $region49
    $region48: #{tpu_custom_call.1} parent=1 // pred_region
      %76 = dma.done [#allocation4], 16
    $region49: #{tpu_custom_call.1} parent=1 // pred_fallthru
      _
    // Predicated region
    $region50: #{tpu_custom_call.1} parent=1 // pred_check
      _
    $region51: #{tpu_custom_call.1} parent=1 // pred_check_branch
      %78 = sbr.rel (0) target = $region53
    $region52: #{tpu_custom_call.1} parent=1 // pred_region
      %79 = dma.done [#allocation6], 16
    $region53: #{tpu_custom_call.1} parent=1 // pred_fallthru
      _
    // Predicated region
    $region54: #{tpu_custom_call.1} parent=1 // pred_check
      _
    $region55: #{tpu_custom_call.1} parent=1 // pred_check_branch
      %81 = sbr.rel (0) target = $region57
    $region56: #{tpu_custom_call.1} parent=1 // pred_region
      %82 = dma.done [#allocation6], 16
    $region57: #{tpu_custom_call.1} parent=1 // pred_fallthru
      _
    // Predicated region
    $region58: #{tpu_custom_call.1} parent=1 // pred_check
      _
    $region59: #{tpu_custom_call.1} parent=1 // pred_check_branch
      %84 = sbr.rel (0) target = $region61
    $region60: #{tpu_custom_call.1} parent=1 // pred_region
      %85 = dma.done [#allocation9], 16
    $region61: #{tpu_custom_call.1} parent=1 // pred_fallthru
      _
    %86 = sfence
    %v87 = vld [vmem:[%s0] sm:$0xff]
    %v88 = vld [vmem:[%s0 + $0x8] sm:$0xff]
    %v89 = vld [vmem:[%s1] sm:$0xff]
    %v90 = vld [vmem:[%s1 + $0x8] sm:$0xff]
    %v91 = vld [vmem:[%s1 + $0x10] sm:$0xff]
    %v92 = vld [vmem:[%s1 + $0x18] sm:$0xff]
    %v93 = vld [vmem:[%s1 + $0x20] sm:$0xff]
    %v94 = vld [vmem:[%s1 + $0x28] sm:$0xff]
    %v95 = vld [vmem:[%s1 + $0x30] sm:$0xff]
    %v96 = vld [vmem:[%s1 + $0x38] sm:$0xff]
    %vm97 = vcmask 523264
    %v99 = vsel %vm97, %v87, 0
    %101 = vmatprep.subr.mxu0 0.0
    %102 = vmatpush1.msra.mxu0 %v89
    %103 = vmatprep.subr.mxu0 0.0
    %104 = vmatpush1.msra.mxu0 %v90
    %105 = vmatprep.subr.mxu0 0.0
    %106 = vmatpush1.msra.mxu0 %v91
    %107 = vmatprep.subr.mxu0 0.0
    %108 = vmatpush1.msra.mxu0 %v92
    %109 = vmatprep.subr.mxu0 0.0
    %110 = vmatpush1.msra.mxu0 %v93
    %111 = vmatprep.subr.mxu0 0.0
    %112 = vmatpush1.msra.mxu0 %v94
    %113 = vmatprep.subr.mxu0 0.0
    %114 = vmatpush1.msra.mxu0 %v95
    %115 = vmatprep.subr.mxu0 0.0
    %116 = vmatpush1.msra.mxu0 %v96
    %117 = vmatprep.subr.mxu0 0.0
    %118 = vmatpush1.msra.mxu0 0.0
    %119 = vmatprep.subr.mxu0 0.0
    %120 = vmatpush1.msra.mxu0 0.0
    %121 = vmatprep.subr.mxu0 0.0
    %122 = vmatpush1.msra.mxu0 0.0
    %123 = vmatprep.subr.mxu0 0.0
    %124 = vmatpush1.msra.mxu0 0.0
    %125 = vmatprep.subr.mxu0 0.0
    %126 = vmatpush1.msra.mxu0 0.0
    %127 = vmatprep.subr.mxu0 0.0
    %128 = vmatpush1.msra.mxu0 0.0
    %129 = vmatprep.subr.mxu0 0.0
    %130 = vmatpush1.msra.mxu0 0.0
    %131 = vmatprep.subr.mxu0 0.0
    %132 = vmatpush1.msra.mxu0 0.0
    %133 = vmatprep.subr.mxu0 0.0
    %134 = vmatpush1.msra.mxu0 0.0
    %135 = vmatprep.subr.mxu0 0.0
    %136 = vmatpush1.msra.mxu0 0.0
    %137 = vmatprep.subr.mxu0 0.0
    %138 = vmatpush1.msra.mxu0 0.0
    %139 = vmatprep.subr.mxu0 0.0
    %140 = vmatpush1.msra.mxu0 0.0
    %141 = vmatprep.subr.mxu0 0.0
    %142 = vmatpush1.msra.mxu0 0.0
    %143 = vmatprep.subr.mxu0 0.0
    %144 = vmatpush1.msra.mxu0 0.0
    %145 = vmatprep.subr.mxu0 0.0
    %146 = vmatpush1.msra.mxu0 0.0
    %147 = vmatprep.subr.mxu0 0.0
    %148 = vmatpush1.msra.mxu0 0.0
    %149 = vmatprep.subr.mxu0 0.0
    %150 = vmatpush1.msra.mxu0 0.0
    %151 = vmatprep.subr.mxu0 0.0
    %152 = vmatpush1.msra.mxu0 0.0
    %153 = vmatprep.subr.mxu0 0.0
    %154 = vmatpush1.msra.mxu0 0.0
    %155 = vmatprep.subr.mxu0 0.0
    %156 = vmatpush1.msra.mxu0 0.0
    %157 = vmatprep.subr.mxu0 0.0
    %158 = vmatpush1.msra.mxu0 0.0
    %159 = vmatprep.subr.mxu0 0.0
    %160 = vmatpush1.msra.mxu0 0.0
    %161 = vmatprep.subr.mxu0 0.0
    %162 = vmatpush1.msra.mxu0 0.0
    %163 = vmatprep.subr.mxu0 0.0
    %164 = vmatpush1.msra.mxu0 0.0
    %165 = vmatprep.mubr.f32.mxu0 0.0
    %166 = vmatmul.mubr.f32.gmra.mrb[0].mxu0 %v99
    %v167 = vpop.f32.mrb[0].mxu0
    %v168 = vadd.f32 0.0, %v167
    %v169 = vpop.f32.mrb[0].mxu0
    %170 = vdwg.mxu0
    %s171 = sld [smem:[#allocation2]]
    %v172 = vstv %s171
    %v173 = vmul.f32 %v172, %v168
    %s174 = sld [smem:[#allocation2 + $0x4]]
    %v175 = vstv %s174
    %v176 = vmul.f32 %v175, %v168
    %s177 = sld [smem:[#allocation2 + $0x8]]
    %v178 = vstv %s177
    %v179 = vmul.f32 %v178, %v168
    %s180 = sld [smem:[#allocation2 + $0xc]]
    %v181 = vstv %s180
    %v182 = vmul.f32 %v181, %v168
    %s183 = sld [smem:[#allocation2 + $0x10]]
    %v184 = vstv %s183
    %v185 = vmul.f32 %v184, %v168
    %s186 = sld [smem:[#allocation2 + $0x14]]
    %v187 = vstv %s186
    %v188 = vmul.f32 %v187, %v168
    %s189 = sld [smem:[#allocation2 + $0x18]]
    %v190 = vstv %s189
    %v191 = vmul.f32 %v190, %v168
    %s192 = sld [smem:[#allocation2 + $0x1c]]
    %v193 = vstv %s192
    %v194 = vmul.f32 %v193, %v168
    %195 = vrot.lane.b32.xlu0 %v87, 64
    %v196 = vpop.permute.xlu0 %195
    %v197 = vsel %vm97, %v196, 0
    %199 = vmatprep.subr.mxu0 0.0
    %200 = vmatpush1.msra.mxu0 %v89
    %201 = vmatprep.subr.mxu0 0.0
    %202 = vmatpush1.msra.mxu0 %v90
    %203 = vmatprep.subr.mxu0 0.0
    %204 = vmatpush1.msra.mxu0 %v91
    %205 = vmatprep.subr.mxu0 0.0
    %206 = vmatpush1.msra.mxu0 %v92
    %207 = vmatprep.subr.mxu0 0.0
    %208 = vmatpush1.msra.mxu0 %v93
    %209 = vmatprep.subr.mxu0 0.0
    %210 = vmatpush1.msra.mxu0 %v94
    %211 = vmatprep.subr.mxu0 0.0
    %212 = vmatpush1.msra.mxu0 %v95
    %213 = vmatprep.subr.mxu0 0.0
    %214 = vmatpush1.msra.mxu0 %v96
    %215 = vmatprep.subr.mxu0 0.0
    %216 = vmatpush1.msra.mxu0 0.0
    %217 = vmatprep.subr.mxu0 0.0
    %218 = vmatpush1.msra.mxu0 0.0
    %219 = vmatprep.subr.mxu0 0.0
    %220 = vmatpush1.msra.mxu0 0.0
    %221 = vmatprep.subr.mxu0 0.0
    %222 = vmatpush1.msra.mxu0 0.0
    %223 = vmatprep.subr.mxu0 0.0
    %224 = vmatpush1.msra.mxu0 0.0
    %225 = vmatprep.subr.mxu0 0.0
    %226 = vmatpush1.msra.mxu0 0.0
    %227 = vmatprep.subr.mxu0 0.0
    %228 = vmatpush1.msra.mxu0 0.0
    %229 = vmatprep.subr.mxu0 0.0
    %230 = vmatpush1.msra.mxu0 0.0
    %231 = vmatprep.subr.mxu0 0.0
    %232 = vmatpush1.msra.mxu0 0.0
    %233 = vmatprep.subr.mxu0 0.0
    %234 = vmatpush1.msra.mxu0 0.0
    %235 = vmatprep.subr.mxu0 0.0
    %236 = vmatpush1.msra.mxu0 0.0
    %237 = vmatprep.subr.mxu0 0.0
    %238 = vmatpush1.msra.mxu0 0.0
    %239 = vmatprep.subr.mxu0 0.0
    %240 = vmatpush1.msra.mxu0 0.0
    %241 = vmatprep.subr.mxu0 0.0
    %242 = vmatpush1.msra.mxu0 0.0
    %243 = vmatprep.subr.mxu0 0.0
    %244 = vmatpush1.msra.mxu0 0.0
    %245 = vmatprep.subr.mxu0 0.0
    %246 = vmatpush1.msra.mxu0 0.0
    %247 = vmatprep.subr.mxu0 0.0
    %248 = vmatpush1.msra.mxu0 0.0
    %249 = vmatprep.subr.mxu0 0.0
    %250 = vmatpush1.msra.mxu0 0.0
    %251 = vmatprep.subr.mxu0 0.0
    %252 = vmatpush1.msra.mxu0 0.0
    %253 = vmatprep.subr.mxu0 0.0
    %254 = vmatpush1.msra.mxu0 0.0
    %255 = vmatprep.subr.mxu0 0.0
    %256 = vmatpush1.msra.mxu0 0.0
    %257 = vmatprep.subr.mxu0 0.0
    %258 = vmatpush1.msra.mxu0 0.0
    %259 = vmatprep.subr.mxu0 0.0
    %260 = vmatpush1.msra.mxu0 0.0
    %261 = vmatprep.subr.mxu0 0.0
    %262 = vmatpush1.msra.mxu0 0.0
    %263 = vmatprep.mubr.f32.mxu0 0.0
    %264 = vmatmul.mubr.f32.gmra.mrb[0].mxu0 %v197
    %v265 = vpop.f32.mrb[0].mxu0
    %v266 = vadd.f32 0.0, %v265
    %v267 = vpop.f32.mrb[0].mxu0
    %268 = vdwg.mxu0
    %s269 = sld [smem:[#allocation2 + $0x1]]
    %v270 = vstv %s269
    %v271 = vmul.f32 %v270, %v266
    %v272 = vadd.f32 %v173, %v271
    %s273 = sld [smem:[#allocation2 + $0x5]]
    %v274 = vstv %s273
    %v275 = vmul.f32 %v274, %v266
    %v276 = vadd.f32 %v176, %v275
    %s277 = sld [smem:[#allocation2 + $0x9]]
    %v278 = vstv %s277
    %v279 = vmul.f32 %v278, %v266
    %v280 = vadd.f32 %v179, %v279
    %s281 = sld [smem:[#allocation2 + $0xd]]
    %v282 = vstv %s281
    %v283 = vmul.f32 %v282, %v266
    %v284 = vadd.f32 %v182, %v283
    %s285 = sld [smem:[#allocation2 + $0x11]]
    %v286 = vstv %s285
    %v287 = vmul.f32 %v286, %v266
    %v288 = vadd.f32 %v185, %v287
    %s289 = sld [smem:[#allocation2 + $0x15]]
    %v290 = vstv %s289
    %v291 = vmul.f32 %v290, %v266
    %v292 = vadd.f32 %v188, %v291
    %s293 = sld [smem:[#allocation2 + $0x19]]
    %v294 = vstv %s293
    %v295 = vmul.f32 %v294, %v266
    %v296 = vadd.f32 %v191, %v295
    %s297 = sld [smem:[#allocation2 + $0x1d]]
    %v298 = vstv %s297
    %v299 = vmul.f32 %v298, %v266
    %v300 = vadd.f32 %v194, %v299
    %v302 = vsel %vm97, %v88, 0
    %304 = vmatprep.subr.mxu0 0.0
    %305 = vmatpush1.msra.mxu0 %v89
    %306 = vmatprep.subr.mxu0 0.0
    %307 = vmatpush1.msra.mxu0 %v90
    %308 = vmatprep.subr.mxu0 0.0
    %309 = vmatpush1.msra.mxu0 %v91
    %310 = vmatprep.subr.mxu0 0.0
    %311 = vmatpush1.msra.mxu0 %v92
    %312 = vmatprep.subr.mxu0 0.0
    %313 = vmatpush1.msra.mxu0 %v93
    %314 = vmatprep.subr.mxu0 0.0
    %315 = vmatpush1.msra.mxu0 %v94
    %316 = vmatprep.subr.mxu0 0.0
    %317 = vmatpush1.msra.mxu0 %v95
    %318 = vmatprep.subr.mxu0 0.0
    %319 = vmatpush1.msra.mxu0 %v96
    %320 = vmatprep.subr.mxu0 0.0
    %321 = vmatpush1.msra.mxu0 0.0
    %322 = vmatprep.subr.mxu0 0.0
    %323 = vmatpush1.msra.mxu0 0.0
    %324 = vmatprep.subr.mxu0 0.0
    %325 = vmatpush1.msra.mxu0 0.0
    %326 = vmatprep.subr.mxu0 0.0
    %327 = vmatpush1.msra.mxu0 0.0
    %328 = vmatprep.subr.mxu0 0.0
    %329 = vmatpush1.msra.mxu0 0.0
    %330 = vmatprep.subr.mxu0 0.0
    %331 = vmatpush1.msra.mxu0 0.0
    %332 = vmatprep.subr.mxu0 0.0
    %333 = vmatpush1.msra.mxu0 0.0
    %334 = vmatprep.subr.mxu0 0.0
    %335 = vmatpush1.msra.mxu0 0.0
    %336 = vmatprep.subr.mxu0 0.0
    %337 = vmatpush1.msra.mxu0 0.0
    %338 = vmatprep.subr.mxu0 0.0
    %339 = vmatpush1.msra.mxu0 0.0
    %340 = vmatprep.subr.mxu0 0.0
    %341 = vmatpush1.msra.mxu0 0.0
    %342 = vmatprep.subr.mxu0 0.0
    %343 = vmatpush1.msra.mxu0 0.0
    %344 = vmatprep.subr.mxu0 0.0
    %345 = vmatpush1.msra.mxu0 0.0
    %346 = vmatprep.subr.mxu0 0.0
    %347 = vmatpush1.msra.mxu0 0.0
    %348 = vmatprep.subr.mxu0 0.0
    %349 = vmatpush1.msra.mxu0 0.0
    %350 = vmatprep.subr.mxu0 0.0
    %351 = vmatpush1.msra.mxu0 0.0
    %352 = vmatprep.subr.mxu0 0.0
    %353 = vmatpush1.msra.mxu0 0.0
    %354 = vmatprep.subr.mxu0 0.0
    %355 = vmatpush1.msra.mxu0 0.0
    %356 = vmatprep.subr.mxu0 0.0
    %357 = vmatpush1.msra.mxu0 0.0
    %358 = vmatprep.subr.mxu0 0.0
    %359 = vmatpush1.msra.mxu0 0.0
    %360 = vmatprep.subr.mxu0 0.0
    %361 = vmatpush1.msra.mxu0 0.0
    %362 = vmatprep.subr.mxu0 0.0
    %363 = vmatpush1.msra.mxu0 0.0
    %364 = vmatprep.subr.mxu0 0.0
    %365 = vmatpush1.msra.mxu0 0.0
    %366 = vmatprep.subr.mxu0 0.0
    %367 = vmatpush1.msra.mxu0 0.0
    %368 = vmatprep.mubr.f32.mxu0 0.0
    %369 = vmatmul.mubr.f32.gmra.mrb[0].mxu0 %v302
    %v370 = vpop.f32.mrb[0].mxu0
    %v371 = vadd.f32 0.0, %v370
    %v372 = vpop.f32.mrb[0].mxu0
    %373 = vdwg.mxu0
    %s374 = sld [smem:[#allocation2 + $0x2]]
    %v375 = vstv %s374
    %v376 = vmul.f32 %v375, %v371
    %v377 = vadd.f32 %v272, %v376
    %s378 = sld [smem:[#allocation2 + $0x6]]
    %v379 = vstv %s378
    %v380 = vmul.f32 %v379, %v371
    %v381 = vadd.f32 %v276, %v380
    %s382 = sld [smem:[#allocation2 + $0xa]]
    %v383 = vstv %s382
    %v384 = vmul.f32 %v383, %v371
    %v385 = vadd.f32 %v280, %v384
    %s386 = sld [smem:[#allocation2 + $0xe]]
    %v387 = vstv %s386
    %v388 = vmul.f32 %v387, %v371
    %v389 = vadd.f32 %v284, %v388
    %s390 = sld [smem:[#allocation2 + $0x12]]
    %v391 = vstv %s390
    %v392 = vmul.f32 %v391, %v371
    %v393 = vadd.f32 %v288, %v392
    %s394 = sld [smem:[#allocation2 + $0x16]]
    %v395 = vstv %s394
    %v396 = vmul.f32 %v395, %v371
    %v397 = vadd.f32 %v292, %v396
    %s398 = sld [smem:[#allocation2 + $0x1a]]
    %v399 = vstv %s398
    %v400 = vmul.f32 %v399, %v371
    %v401 = vadd.f32 %v296, %v400
    %s402 = sld [smem:[#allocation2 + $0x1e]]
    %v403 = vstv %s402
    %v404 = vmul.f32 %v403, %v371
    %v405 = vadd.f32 %v300, %v404
    %406 = vrot.lane.b32.xlu0 %v88, 64
    %v407 = vpop.permute.xlu0 %406
    %v408 = vsel %vm97, %v407, 0
    %410 = vmatprep.subr.mxu0 0.0
    %411 = vmatpush1.msra.mxu0 %v89
    %412 = vmatprep.subr.mxu0 0.0
    %413 = vmatpush1.msra.mxu0 %v90
    %414 = vmatprep.subr.mxu0 0.0
    %415 = vmatpush1.msra.mxu0 %v91
    %416 = vmatprep.subr.mxu0 0.0
    %417 = vmatpush1.msra.mxu0 %v92
    %418 = vmatprep.subr.mxu0 0.0
    %419 = vmatpush1.msra.mxu0 %v93
    %420 = vmatprep.subr.mxu0 0.0
    %421 = vmatpush1.msra.mxu0 %v94
    %422 = vmatprep.subr.mxu0 0.0
    %423 = vmatpush1.msra.mxu0 %v95
    %424 = vmatprep.subr.mxu0 0.0
    %425 = vmatpush1.msra.mxu0 %v96
    %426 = vmatprep.subr.mxu0 0.0
    %427 = vmatpush1.msra.mxu0 0.0
    %428 = vmatprep.subr.mxu0 0.0
    %429 = vmatpush1.msra.mxu0 0.0
    %430 = vmatprep.subr.mxu0 0.0
    %431 = vmatpush1.msra.mxu0 0.0
    %432 = vmatprep.subr.mxu0 0.0
    %433 = vmatpush1.msra.mxu0 0.0
    %434 = vmatprep.subr.mxu0 0.0
    %435 = vmatpush1.msra.mxu0 0.0
    %436 = vmatprep.subr.mxu0 0.0
    %437 = vmatpush1.msra.mxu0 0.0
    %438 = vmatprep.subr.mxu0 0.0
    %439 = vmatpush1.msra.mxu0 0.0
    %440 = vmatprep.subr.mxu0 0.0
    %441 = vmatpush1.msra.mxu0 0.0
    %442 = vmatprep.subr.mxu0 0.0
    %443 = vmatpush1.msra.mxu0 0.0
    %444 = vmatprep.subr.mxu0 0.0
    %445 = vmatpush1.msra.mxu0 0.0
    %446 = vmatprep.subr.mxu0 0.0
    %447 = vmatpush1.msra.mxu0 0.0
    %448 = vmatprep.subr.mxu0 0.0
    %449 = vmatpush1.msra.mxu0 0.0
    %450 = vmatprep.subr.mxu0 0.0
    %451 = vmatpush1.msra.mxu0 0.0
    %452 = vmatprep.subr.mxu0 0.0
    %453 = vmatpush1.msra.mxu0 0.0
    %454 = vmatprep.subr.mxu0 0.0
    %455 = vmatpush1.msra.mxu0 0.0
    %456 = vmatprep.subr.mxu0 0.0
    %457 = vmatpush1.msra.mxu0 0.0
    %458 = vmatprep.subr.mxu0 0.0
    %459 = vmatpush1.msra.mxu0 0.0
    %460 = vmatprep.subr.mxu0 0.0
    %461 = vmatpush1.msra.mxu0 0.0
    %462 = vmatprep.subr.mxu0 0.0
    %463 = vmatpush1.msra.mxu0 0.0
    %464 = vmatprep.subr.mxu0 0.0
    %465 = vmatpush1.msra.mxu0 0.0
    %466 = vmatprep.subr.mxu0 0.0
    %467 = vmatpush1.msra.mxu0 0.0
    %468 = vmatprep.subr.mxu0 0.0
    %469 = vmatpush1.msra.mxu0 0.0
    %470 = vmatprep.subr.mxu0 0.0
    %471 = vmatpush1.msra.mxu0 0.0
    %472 = vmatprep.subr.mxu0 0.0
    %473 = vmatpush1.msra.mxu0 0.0
    %474 = vmatprep.mubr.f32.mxu0 0.0
    %475 = vmatmul.mubr.f32.gmra.mrb[0].mxu0 %v408
    %v476 = vpop.f32.mrb[0].mxu0
    %v477 = vadd.f32 0.0, %v476
    %v478 = vpop.f32.mrb[0].mxu0
    %479 = vdwg.mxu0
    %s480 = sld [smem:[#allocation2 + $0x3]]
    %v481 = vstv %s480
    %v482 = vmul.f32 %v481, %v477
    %v483 = vadd.f32 %v377, %v482
    %s484 = sld [smem:[#allocation2 + $0x7]]
    %v485 = vstv %s484
    %v486 = vmul.f32 %v485, %v477
    %v487 = vadd.f32 %v381, %v486
    %s488 = sld [smem:[#allocation2 + $0xb]]
    %v489 = vstv %s488
    %v490 = vmul.f32 %v489, %v477
    %v491 = vadd.f32 %v385, %v490
    %s492 = sld [smem:[#allocation2 + $0xf]]
    %v493 = vstv %s492
    %v494 = vmul.f32 %v493, %v477
    %v495 = vadd.f32 %v389, %v494
    %s496 = sld [smem:[#allocation2 + $0x13]]
    %v497 = vstv %s496
    %v498 = vmul.f32 %v497, %v477
    %v499 = vadd.f32 %v393, %v498
    %s500 = sld [smem:[#allocation2 + $0x17]]
    %v501 = vstv %s500
    %v502 = vmul.f32 %v501, %v477
    %v503 = vadd.f32 %v397, %v502
    %s504 = sld [smem:[#allocation2 + $0x1b]]
    %v505 = vstv %s504
    %v506 = vmul.f32 %v505, %v477
    %v507 = vadd.f32 %v401, %v506
    %s508 = sld [smem:[#allocation2 + $0x1f]]
    %v509 = vstv %s508
    %v510 = vmul.f32 %v509, %v477
    %v511 = vadd.f32 %v405, %v510
    %513 = vrot.lane.b32.xlu0 %v487, 16
    %v514 = vpop.permute.xlu0 %513
    %517 = vrot.lane.b32.xlu0 %v491, 32
    %v518 = vpop.permute.xlu0 %517
    %521 = vrot.lane.b32.xlu0 %v495, 48
    %v522 = vpop.permute.xlu0 %521
    %525 = vrot.lane.b32.xlu0 %v499, 64
    %v526 = vpop.permute.xlu0 %525
    %529 = vrot.lane.b32.xlu0 %v503, 80
    %v530 = vpop.permute.xlu0 %529
    %533 = vrot.lane.b32.xlu0 %v507, 96
    %v534 = vpop.permute.xlu0 %533
    %537 = vrot.lane.b32.xlu0 %v511, 112
    %v538 = vpop.permute.xlu0 %537
    %vm540 = vcmask 130048
    %v541 = vsel %vm540, %v483, %v514
    %vm542 = vcmask 261120
    %v543 = vsel %vm542, %v541, %v518
    %vm544 = vcmask 392192
    %v545 = vsel %vm544, %v543, %v522
    %v546 = vsel %vm97, %v545, %v526
    %vm547 = vcmask 654336
    %v548 = vsel %vm547, %v546, %v530
    %vm549 = vcmask 785408
    %v550 = vsel %vm549, %v548, %v534
    %vm551 = vcmask 916480
    %v552 = vsel %vm551, %v550, %v538
    %v553 = vld [vmem:[%s2] sm:$0xff]
    %v554 = vld [vmem:[%s2 + $0x8] sm:$0xff]
    %v555 = vld [vmem:[%s2 + $0x10] sm:$0xff]
    %v556 = vld [vmem:[%s2 + $0x18] sm:$0xff]
    %v557 = vld [vmem:[%s2 + $0x20] sm:$0xff]
    %v558 = vld [vmem:[%s2 + $0x28] sm:$0xff]
    %v559 = vld [vmem:[%s2 + $0x30] sm:$0xff]
    %v560 = vld [vmem:[%s2 + $0x38] sm:$0xff]
    %v561 = vld [vmem:[%s2 + $0x40] sm:$0xff]
    %v562 = vld [vmem:[%s2 + $0x48] sm:$0xff]
    %v563 = vld [vmem:[%s2 + $0x50] sm:$0xff]
    %v564 = vld [vmem:[%s2 + $0x58] sm:$0xff]
    %v565 = vld [vmem:[%s2 + $0x60] sm:$0xff]
    %v566 = vld [vmem:[%s2 + $0x68] sm:$0xff]
    %v567 = vld [vmem:[%s2 + $0x70] sm:$0xff]
    %v568 = vld [vmem:[%s2 + $0x78] sm:$0xff]
    %569 = vmatprep.subr.mxu0 0.0
    %570 = vmatpush1.msra.mxu0 %v553
    %571 = vmatprep.subr.mxu0 0.0
    %572 = vmatpush1.msra.mxu0 %v554
    %573 = vmatprep.subr.mxu0 0.0
    %574 = vmatpush1.msra.mxu0 %v555
    %575 = vmatprep.subr.mxu0 0.0
    %576 = vmatpush1.msra.mxu0 %v556
    %577 = vmatprep.subr.mxu0 0.0
    %578 = vmatpush1.msra.mxu0 %v557
    %579 = vmatprep.subr.mxu0 0.0
    %580 = vmatpush1.msra.mxu0 %v558
    %581 = vmatprep.subr.mxu0 0.0
    %582 = vmatpush1.msra.mxu0 %v559
    %583 = vmatprep.subr.mxu0 0.0
    %584 = vmatpush1.msra.mxu0 %v560
    %585 = vmatprep.subr.mxu0 0.0
    %586 = vmatpush1.msra.mxu0 %v561
    %587 = vmatprep.subr.mxu0 0.0
    %588 = vmatpush1.msra.mxu0 %v562
    %589 = vmatprep.subr.mxu0 0.0
    %590 = vmatpush1.msra.mxu0 %v563
    %591 = vmatprep.subr.mxu0 0.0
    %592 = vmatpush1.msra.mxu0 %v564
    %593 = vmatprep.subr.mxu0 0.0
    %594 = vmatpush1.msra.mxu0 %v565
    %595 = vmatprep.subr.mxu0 0.0
    %596 = vmatpush1.msra.mxu0 %v566
    %597 = vmatprep.subr.mxu0 0.0
    %598 = vmatpush1.msra.mxu0 %v567
    %599 = vmatprep.subr.mxu0 0.0
    %600 = vmatpush1.msra.mxu0 %v568
    %601 = vmatprep.subr.mxu0 0.0
    %602 = vmatpush1.msra.mxu0 0.0
    %603 = vmatprep.subr.mxu0 0.0
    %604 = vmatpush1.msra.mxu0 0.0
    %605 = vmatprep.subr.mxu0 0.0
    %606 = vmatpush1.msra.mxu0 0.0
    %607 = vmatprep.subr.mxu0 0.0
    %608 = vmatpush1.msra.mxu0 0.0
    %609 = vmatprep.subr.mxu0 0.0
    %610 = vmatpush1.msra.mxu0 0.0
    %611 = vmatprep.subr.mxu0 0.0
    %612 = vmatpush1.msra.mxu0 0.0
    %613 = vmatprep.subr.mxu0 0.0
    %614 = vmatpush1.msra.mxu0 0.0
    %615 = vmatprep.subr.mxu0 0.0
    %616 = vmatpush1.msra.mxu0 0.0
    %617 = vmatprep.subr.mxu0 0.0
    %618 = vmatpush1.msra.mxu0 0.0
    %619 = vmatprep.subr.mxu0 0.0
    %620 = vmatpush1.msra.mxu0 0.0
    %621 = vmatprep.subr.mxu0 0.0
    %622 = vmatpush1.msra.mxu0 0.0
    %623 = vmatprep.subr.mxu0 0.0
    %624 = vmatpush1.msra.mxu0 0.0
    %625 = vmatprep.subr.mxu0 0.0
    %626 = vmatpush1.msra.mxu0 0.0
    %627 = vmatprep.subr.mxu0 0.0
    %628 = vmatpush1.msra.mxu0 0.0
    %629 = vmatprep.subr.mxu0 0.0
    %630 = vmatpush1.msra.mxu0 0.0
    %631 = vmatprep.subr.mxu0 0.0
    %632 = vmatpush1.msra.mxu0 0.0
    %633 = vmatprep.mubr.f32.mxu0 0.0
    %634 = vmatmul.mubr.f32.gmra.mrb[0].mxu0 %v87
    %v635 = vpop.f32.mrb[0].mxu0
    %v636 = vadd.f32 0.0, %v635
    %v637 = vpop.f32.mrb[0].mxu0
    %638 = vdwg.mxu0
    %s639 = sld [smem:[#allocation5]]
    %v640 = vstv %s639
    %v641 = vmul.f32 %v640, %v636
    %s642 = sld [smem:[#allocation5 + $0x2]]
    %v643 = vstv %s642
    %v644 = vmul.f32 %v643, %v636
    %s645 = sld [smem:[#allocation5 + $0x4]]
    %v646 = vstv %s645
    %v647 = vmul.f32 %v646, %v636
    %s648 = sld [smem:[#allocation5 + $0x6]]
    %v649 = vstv %s648
    %v650 = vmul.f32 %v649, %v636
    %651 = vmatprep.subr.mxu0 0.0
    %652 = vmatpush1.msra.mxu0 %v553
    %653 = vmatprep.subr.mxu0 0.0
    %654 = vmatpush1.msra.mxu0 %v554
    %655 = vmatprep.subr.mxu0 0.0
    %656 = vmatpush1.msra.mxu0 %v555
    %657 = vmatprep.subr.mxu0 0.0
    %658 = vmatpush1.msra.mxu0 %v556
    %659 = vmatprep.subr.mxu0 0.0
    %660 = vmatpush1.msra.mxu0 %v557
    %661 = vmatprep.subr.mxu0 0.0
    %662 = vmatpush1.msra.mxu0 %v558
    %663 = vmatprep.subr.mxu0 0.0
    %664 = vmatpush1.msra.mxu0 %v559
    %665 = vmatprep.subr.mxu0 0.0
    %666 = vmatpush1.msra.mxu0 %v560
    %667 = vmatprep.subr.mxu0 0.0
    %668 = vmatpush1.msra.mxu0 %v561
    %669 = vmatprep.subr.mxu0 0.0
    %670 = vmatpush1.msra.mxu0 %v562
    %671 = vmatprep.subr.mxu0 0.0
    %672 = vmatpush1.msra.mxu0 %v563
    %673 = vmatprep.subr.mxu0 0.0
    %674 = vmatpush1.msra.mxu0 %v564
    %675 = vmatprep.subr.mxu0 0.0
    %676 = vmatpush1.msra.mxu0 %v565
    %677 = vmatprep.subr.mxu0 0.0
    %678 = vmatpush1.msra.mxu0 %v566
    %679 = vmatprep.subr.mxu0 0.0
    %680 = vmatpush1.msra.mxu0 %v567
    %681 = vmatprep.subr.mxu0 0.0
    %682 = vmatpush1.msra.mxu0 %v568
    %683 = vmatprep.subr.mxu0 0.0
    %684 = vmatpush1.msra.mxu0 0.0
    %685 = vmatprep.subr.mxu0 0.0
    %686 = vmatpush1.msra.mxu0 0.0
    %687 = vmatprep.subr.mxu0 0.0
    %688 = vmatpush1.msra.mxu0 0.0
    %689 = vmatprep.subr.mxu0 0.0
    %690 = vmatpush1.msra.mxu0 0.0
    %691 = vmatprep.subr.mxu0 0.0
    %692 = vmatpush1.msra.mxu0 0.0
    %693 = vmatprep.subr.mxu0 0.0
    %694 = vmatpush1.msra.mxu0 0.0
    %695 = vmatprep.subr.mxu0 0.0
    %696 = vmatpush1.msra.mxu0 0.0
    %697 = vmatprep.subr.mxu0 0.0
    %698 = vmatpush1.msra.mxu0 0.0
    %699 = vmatprep.subr.mxu0 0.0
    %700 = vmatpush1.msra.mxu0 0.0
    %701 = vmatprep.subr.mxu0 0.0
    %702 = vmatpush1.msra.mxu0 0.0
    %703 = vmatprep.subr.mxu0 0.0
    %704 = vmatpush1.msra.mxu0 0.0
    %705 = vmatprep.subr.mxu0 0.0
    %706 = vmatpush1.msra.mxu0 0.0
    %707 = vmatprep.subr.mxu0 0.0
    %708 = vmatpush1.msra.mxu0 0.0
    %709 = vmatprep.subr.mxu0 0.0
    %710 = vmatpush1.msra.mxu0 0.0
    %711 = vmatprep.subr.mxu0 0.0
    %712 = vmatpush1.msra.mxu0 0.0
    %713 = vmatprep.subr.mxu0 0.0
    %714 = vmatpush1.msra.mxu0 0.0
    %715 = vmatprep.mubr.f32.mxu0 0.0
    %716 = vmatmul.mubr.f32.gmra.mrb[0].mxu0 %v88
    %v717 = vpop.f32.mrb[0].mxu0
    %v718 = vadd.f32 0.0, %v717
    %v719 = vpop.f32.mrb[0].mxu0
    %720 = vdwg.mxu0
    %s721 = sld [smem:[#allocation5 + $0x1]]
    %v722 = vstv %s721
    %v723 = vmul.f32 %v722, %v718
    %v724 = vadd.f32 %v641, %v723
    %s725 = sld [smem:[#allocation5 + $0x3]]
    %v726 = vstv %s725
    %v727 = vmul.f32 %v726, %v718
    %v728 = vadd.f32 %v644, %v727
    %s729 = sld [smem:[#allocation5 + $0x5]]
    %v730 = vstv %s729
    %v731 = vmul.f32 %v730, %v718
    %v732 = vadd.f32 %v647, %v731
    %s733 = sld [smem:[#allocation5 + $0x7]]
    %v734 = vstv %s733
    %v735 = vmul.f32 %v734, %v718
    %v736 = vadd.f32 %v650, %v735
    %738 = vrot.lane.b32.xlu0 %v728, 32
    %v739 = vpop.permute.xlu0 %738
    %742 = vrot.lane.b32.xlu0 %v732, 64
    %v743 = vpop.permute.xlu0 %742
    %746 = vrot.lane.b32.xlu0 %v736, 96
    %v747 = vpop.permute.xlu0 %746
    %v749 = vsel %vm542, %v724, %v739
    %v750 = vsel %vm97, %v749, %v743
    %v751 = vsel %vm549, %v750, %v747
    %v752 = vadd.f32 %v552, %v751
    %v753 = vld [vmem:[%s5] sm:$0x1]
    %v755 = vlaneseq
    %v756 = vshrl.u32 %v755, 7
    %v757 = vsub.s32 0, %v756
    %v758 = vrot.slane %v753, %v757
    %v760 = vadd.f32 %v752, %v758
    %v761 = vld [vmem:[%s6] sm:$0xff]
    %v762 = vld [vmem:[%s6 + $0x8] sm:$0xff]
    %v763 = vld [vmem:[%s6 + $0x10] sm:$0xff]
    %v764 = vld [vmem:[%s6 + $0x18] sm:$0xff]
    %v765 = vld [vmem:[%s6 + $0x20] sm:$0xff]
    %v766 = vld [vmem:[%s6 + $0x28] sm:$0xff]
    %v767 = vld [vmem:[%s6 + $0x30] sm:$0xff]
    %v768 = vld [vmem:[%s6 + $0x38] sm:$0xff]
    %769 = vmatprep.subr.mxu0 0.0
    %770 = vmatpush1.msra.mxu0 %v761
    %771 = vmatprep.subr.mxu0 0.0
    %772 = vmatpush1.msra.mxu0 %v762
    %773 = vmatprep.subr.mxu0 0.0
    %774 = vmatpush1.msra.mxu0 %v763
    %775 = vmatprep.subr.mxu0 0.0
    %776 = vmatpush1.msra.mxu0 %v764
    %777 = vmatprep.subr.mxu0 0.0
    %778 = vmatpush1.msra.mxu0 %v765
    %779 = vmatprep.subr.mxu0 0.0
    %780 = vmatpush1.msra.mxu0 %v766
    %781 = vmatprep.subr.mxu0 0.0
    %782 = vmatpush1.msra.mxu0 %v767
    %783 = vmatprep.subr.mxu0 0.0
    %784 = vmatpush1.msra.mxu0 %v768
    %785 = vmatprep.subr.mxu0 0.0
    %786 = vmatpush1.msra.mxu0 0.0
    %787 = vmatprep.subr.mxu0 0.0
    %788 = vmatpush1.msra.mxu0 0.0
    %789 = vmatprep.subr.mxu0 0.0
    %790 = vmatpush1.msra.mxu0 0.0
    %791 = vmatprep.subr.mxu0 0.0
    %792 = vmatpush1.msra.mxu0 0.0
    %793 = vmatprep.subr.mxu0 0.0
    %794 = vmatpush1.msra.mxu0 0.0
    %795 = vmatprep.subr.mxu0 0.0
    %796 = vmatpush1.msra.mxu0 0.0
    %797 = vmatprep.subr.mxu0 0.0
    %798 = vmatpush1.msra.mxu0 0.0
    %799 = vmatprep.subr.mxu0 0.0
    %800 = vmatpush1.msra.mxu0 0.0
    %801 = vmatprep.subr.mxu0 0.0
    %802 = vmatpush1.msra.mxu0 0.0
    %803 = vmatprep.subr.mxu0 0.0
    %804 = vmatpush1.msra.mxu0 0.0
    %805 = vmatprep.subr.mxu0 0.0
    %806 = vmatpush1.msra.mxu0 0.0
    %807 = vmatprep.subr.mxu0 0.0
    %808 = vmatpush1.msra.mxu0 0.0
    %809 = vmatprep.subr.mxu0 0.0
    %810 = vmatpush1.msra.mxu0 0.0
    %811 = vmatprep.subr.mxu0 0.0
    %812 = vmatpush1.msra.mxu0 0.0
    %813 = vmatprep.subr.mxu0 0.0
    %814 = vmatpush1.msra.mxu0 0.0
    %815 = vmatprep.subr.mxu0 0.0
    %816 = vmatpush1.msra.mxu0 0.0
    %817 = vmatprep.subr.mxu0 0.0
    %818 = vmatpush1.msra.mxu0 0.0
    %819 = vmatprep.subr.mxu0 0.0
    %820 = vmatpush1.msra.mxu0 0.0
    %821 = vmatprep.subr.mxu0 0.0
    %822 = vmatpush1.msra.mxu0 0.0
    %823 = vmatprep.subr.mxu0 0.0
    %824 = vmatpush1.msra.mxu0 0.0
    %825 = vmatprep.subr.mxu0 0.0
    %826 = vmatpush1.msra.mxu0 0.0
    %827 = vmatprep.subr.mxu0 0.0
    %828 = vmatpush1.msra.mxu0 0.0
    %829 = vmatprep.subr.mxu0 0.0
    %830 = vmatpush1.msra.mxu0 0.0
    %831 = vmatprep.subr.mxu0 0.0
    %832 = vmatpush1.msra.mxu0 0.0
    %833 = vmatprep.mubr.f32.mxu0 0.0
    %834 = vmatmul.mubr.f32.gmra.mrb[0].mxu0 %v99
    %v835 = vpop.f32.mrb[0].mxu0
    %v836 = vadd.f32 0.0, %v835
    %v837 = vpop.f32.mrb[0].mxu0
    %838 = vdwg.mxu0
    %s839 = sld [smem:[#allocation7]]
    %v840 = vstv %s839
    %v841 = vmul.f32 %v840, %v836
    %s842 = sld [smem:[#allocation7 + $0x4]]
    %v843 = vstv %s842
    %v844 = vmul.f32 %v843, %v836
    %s845 = sld [smem:[#allocation7 + $0x8]]
    %v846 = vstv %s845
    %v847 = vmul.f32 %v846, %v836
    %s848 = sld [smem:[#allocation7 + $0xc]]
    %v849 = vstv %s848
    %v850 = vmul.f32 %v849, %v836
    %s851 = sld [smem:[#allocation7 + $0x10]]
    %v852 = vstv %s851
    %v853 = vmul.f32 %v852, %v836
    %s854 = sld [smem:[#allocation7 + $0x14]]
    %v855 = vstv %s854
    %v856 = vmul.f32 %v855, %v836
    %s857 = sld [smem:[#allocation7 + $0x18]]
    %v858 = vstv %s857
    %v859 = vmul.f32 %v858, %v836
    %s860 = sld [smem:[#allocation7 + $0x1c]]
    %v861 = vstv %s860
    %v862 = vmul.f32 %v861, %v836
    %863 = vmatprep.subr.mxu0 0.0
    %864 = vmatpush1.msra.mxu0 %v761
    %865 = vmatprep.subr.mxu0 0.0
    %866 = vmatpush1.msra.mxu0 %v762
    %867 = vmatprep.subr.mxu0 0.0
    %868 = vmatpush1.msra.mxu0 %v763
    %869 = vmatprep.subr.mxu0 0.0
    %870 = vmatpush1.msra.mxu0 %v764
    %871 = vmatprep.subr.mxu0 0.0
    %872 = vmatpush1.msra.mxu0 %v765
    %873 = vmatprep.subr.mxu0 0.0
    %874 = vmatpush1.msra.mxu0 %v766
    %875 = vmatprep.subr.mxu0 0.0
    %876 = vmatpush1.msra.mxu0 %v767
    %877 = vmatprep.subr.mxu0 0.0
    %878 = vmatpush1.msra.mxu0 %v768
    %879 = vmatprep.subr.mxu0 0.0
    %880 = vmatpush1.msra.mxu0 0.0
    %881 = vmatprep.subr.mxu0 0.0
    %882 = vmatpush1.msra.mxu0 0.0
    %883 = vmatprep.subr.mxu0 0.0
    %884 = vmatpush1.msra.mxu0 0.0
    %885 = vmatprep.subr.mxu0 0.0
    %886 = vmatpush1.msra.mxu0 0.0
    %887 = vmatprep.subr.mxu0 0.0
    %888 = vmatpush1.msra.mxu0 0.0
    %889 = vmatprep.subr.mxu0 0.0
    %890 = vmatpush1.msra.mxu0 0.0
    %891 = vmatprep.subr.mxu0 0.0
    %892 = vmatpush1.msra.mxu0 0.0
    %893 = vmatprep.subr.mxu0 0.0
    %894 = vmatpush1.msra.mxu0 0.0
    %895 = vmatprep.subr.mxu0 0.0
    %896 = vmatpush1.msra.mxu0 0.0
    %897 = vmatprep.subr.mxu0 0.0
    %898 = vmatpush1.msra.mxu0 0.0
    %899 = vmatprep.subr.mxu0 0.0
    %900 = vmatpush1.msra.mxu0 0.0
    %901 = vmatprep.subr.mxu0 0.0
    %902 = vmatpush1.msra.mxu0 0.0
    %903 = vmatprep.subr.mxu0 0.0
    %904 = vmatpush1.msra.mxu0 0.0
    %905 = vmatprep.subr.mxu0 0.0
    %906 = vmatpush1.msra.mxu0 0.0
    %907 = vmatprep.subr.mxu0 0.0
    %908 = vmatpush1.msra.mxu0 0.0
    %909 = vmatprep.subr.mxu0 0.0
    %910 = vmatpush1.msra.mxu0 0.0
    %911 = vmatprep.subr.mxu0 0.0
    %912 = vmatpush1.msra.mxu0 0.0
    %913 = vmatprep.subr.mxu0 0.0
    %914 = vmatpush1.msra.mxu0 0.0
    %915 = vmatprep.subr.mxu0 0.0
    %916 = vmatpush1.msra.mxu0 0.0
    %917 = vmatprep.subr.mxu0 0.0
    %918 = vmatpush1.msra.mxu0 0.0
    %919 = vmatprep.subr.mxu0 0.0
    %920 = vmatpush1.msra.mxu0 0.0
    %921 = vmatprep.subr.mxu0 0.0
    %922 = vmatpush1.msra.mxu0 0.0
    %923 = vmatprep.subr.mxu0 0.0
    %924 = vmatpush1.msra.mxu0 0.0
    %925 = vmatprep.subr.mxu0 0.0
    %926 = vmatpush1.msra.mxu0 0.0
    %927 = vmatprep.mubr.f32.mxu0 0.0
    %928 = vmatmul.mubr.f32.gmra.mrb[0].mxu0 %v197
    %v929 = vpop.f32.mrb[0].mxu0
    %v930 = vadd.f32 0.0, %v929
    %v931 = vpop.f32.mrb[0].mxu0
    %932 = vdwg.mxu0
    %s933 = sld [smem:[#allocation7 + $0x1]]
    %v934 = vstv %s933
    %v935 = vmul.f32 %v934, %v930
    %v936 = vadd.f32 %v841, %v935
    %s937 = sld [smem:[#allocation7 + $0x5]]
    %v938 = vstv %s937
    %v939 = vmul.f32 %v938, %v930
    %v940 = vadd.f32 %v844, %v939
    %s941 = sld [smem:[#allocation7 + $0x9]]
    %v942 = vstv %s941
    %v943 = vmul.f32 %v942, %v930
    %v944 = vadd.f32 %v847, %v943
    %s945 = sld [smem:[#allocation7 + $0xd]]
    %v946 = vstv %s945
    %v947 = vmul.f32 %v946, %v930
    %v948 = vadd.f32 %v850, %v947
    %s949 = sld [smem:[#allocation7 + $0x11]]
    %v950 = vstv %s949
    %v951 = vmul.f32 %v950, %v930
    %v952 = vadd.f32 %v853, %v951
    %s953 = sld [smem:[#allocation7 + $0x15]]
    %v954 = vstv %s953
    %v955 = vmul.f32 %v954, %v930
    %v956 = vadd.f32 %v856, %v955
    %s957 = sld [smem:[#allocation7 + $0x19]]
    %v958 = vstv %s957
    %v959 = vmul.f32 %v958, %v930
    %v960 = vadd.f32 %v859, %v959
    %s961 = sld [smem:[#allocation7 + $0x1d]]
    %v962 = vstv %s961
    %v963 = vmul.f32 %v962, %v930
    %v964 = vadd.f32 %v862, %v963
    %965 = vmatprep.subr.mxu0 0.0
    %966 = vmatpush1.msra.mxu0 %v761
    %967 = vmatprep.subr.mxu0 0.0
    %968 = vmatpush1.msra.mxu0 %v762
    %969 = vmatprep.subr.mxu0 0.0
    %970 = vmatpush1.msra.mxu0 %v763
    %971 = vmatprep.subr.mxu0 0.0
    %972 = vmatpush1.msra.mxu0 %v764
    %973 = vmatprep.subr.mxu0 0.0
    %974 = vmatpush1.msra.mxu0 %v765
    %975 = vmatprep.subr.mxu0 0.0
    %976 = vmatpush1.msra.mxu0 %v766
    %977 = vmatprep.subr.mxu0 0.0
    %978 = vmatpush1.msra.mxu0 %v767
    %979 = vmatprep.subr.mxu0 0.0
    %980 = vmatpush1.msra.mxu0 %v768
    %981 = vmatprep.subr.mxu0 0.0
    %982 = vmatpush1.msra.mxu0 0.0
    %983 = vmatprep.subr.mxu0 0.0
    %984 = vmatpush1.msra.mxu0 0.0
    %985 = vmatprep.subr.mxu0 0.0
    %986 = vmatpush1.msra.mxu0 0.0
    %987 = vmatprep.subr.mxu0 0.0
    %988 = vmatpush1.msra.mxu0 0.0
    %989 = vmatprep.subr.mxu0 0.0
    %990 = vmatpush1.msra.mxu0 0.0
    %991 = vmatprep.subr.mxu0 0.0
    %992 = vmatpush1.msra.mxu0 0.0
    %993 = vmatprep.subr.mxu0 0.0
    %994 = vmatpush1.msra.mxu0 0.0
    %995 = vmatprep.subr.mxu0 0.0
    %996 = vmatpush1.msra.mxu0 0.0
    %997 = vmatprep.subr.mxu0 0.0
    %998 = vmatpush1.msra.mxu0 0.0
    %999 = vmatprep.subr.mxu0 0.0
    %1000 = vmatpush1.msra.mxu0 0.0
    %1001 = vmatprep.subr.mxu0 0.0
    %1002 = vmatpush1.msra.mxu0 0.0
    %1003 = vmatprep.subr.mxu0 0.0
    %1004 = vmatpush1.msra.mxu0 0.0
    %1005 = vmatprep.subr.mxu0 0.0
    %1006 = vmatpush1.msra.mxu0 0.0
    %1007 = vmatprep.subr.mxu0 0.0
    %1008 = vmatpush1.msra.mxu0 0.0
    %1009 = vmatprep.subr.mxu0 0.0
    %1010 = vmatpush1.msra.mxu0 0.0
    %1011 = vmatprep.subr.mxu0 0.0
    %1012 = vmatpush1.msra.mxu0 0.0
    %1013 = vmatprep.subr.mxu0 0.0
    %1014 = vmatpush1.msra.mxu0 0.0
    %1015 = vmatprep.subr.mxu0 0.0
    %1016 = vmatpush1.msra.mxu0 0.0
    %1017 = vmatprep.subr.mxu0 0.0
    %1018 = vmatpush1.msra.mxu0 0.0
    %1019 = vmatprep.subr.mxu0 0.0
    %1020 = vmatpush1.msra.mxu0 0.0
    %1021 = vmatprep.subr.mxu0 0.0
    %1022 = vmatpush1.msra.mxu0 0.0
    %1023 = vmatprep.subr.mxu0 0.0
    %1024 = vmatpush1.msra.mxu0 0.0
    %1025 = vmatprep.subr.mxu0 0.0
    %1026 = vmatpush1.msra.mxu0 0.0
    %1027 = vmatprep.subr.mxu0 0.0
    %1028 = vmatpush1.msra.mxu0 0.0
    %1029 = vmatprep.mubr.f32.mxu0 0.0
    %1030 = vmatmul.mubr.f32.gmra.mrb[0].mxu0 %v302
    %v1031 = vpop.f32.mrb[0].mxu0
    %v1032 = vadd.f32 0.0, %v1031
    %v1033 = vpop.f32.mrb[0].mxu0
    %1034 = vdwg.mxu0
    %s1035 = sld [smem:[#allocation7 + $0x2]]
    %v1036 = vstv %s1035
    %v1037 = vmul.f32 %v1036, %v1032
    %v1038 = vadd.f32 %v936, %v1037
    %s1039 = sld [smem:[#allocation7 + $0x6]]
    %v1040 = vstv %s1039
    %v1041 = vmul.f32 %v1040, %v1032
    %v1042 = vadd.f32 %v940, %v1041
    %s1043 = sld [smem:[#allocation7 + $0xa]]
    %v1044 = vstv %s1043
    %v1045 = vmul.f32 %v1044, %v1032
    %v1046 = vadd.f32 %v944, %v1045
    %s1047 = sld [smem:[#allocation7 + $0xe]]
    %v1048 = vstv %s1047
    %v1049 = vmul.f32 %v1048, %v1032
    %v1050 = vadd.f32 %v948, %v1049
    %s1051 = sld [smem:[#allocation7 + $0x12]]
    %v1052 = vstv %s1051
    %v1053 = vmul.f32 %v1052, %v1032
    %v1054 = vadd.f32 %v952, %v1053
    %s1055 = sld [smem:[#allocation7 + $0x16]]
    %v1056 = vstv %s1055
    %v1057 = vmul.f32 %v1056, %v1032
    %v1058 = vadd.f32 %v956, %v1057
    %s1059 = sld [smem:[#allocation7 + $0x1a]]
    %v1060 = vstv %s1059
    %v1061 = vmul.f32 %v1060, %v1032
    %v1062 = vadd.f32 %v960, %v1061
    %s1063 = sld [smem:[#allocation7 + $0x1e]]
    %v1064 = vstv %s1063
    %v1065 = vmul.f32 %v1064, %v1032
    %v1066 = vadd.f32 %v964, %v1065
    %1067 = vmatprep.subr.mxu0 0.0
    %1068 = vmatpush1.msra.mxu0 %v761
    %1069 = vmatprep.subr.mxu0 0.0
    %1070 = vmatpush1.msra.mxu0 %v762
    %1071 = vmatprep.subr.mxu0 0.0
    %1072 = vmatpush1.msra.mxu0 %v763
    %1073 = vmatprep.subr.mxu0 0.0
    %1074 = vmatpush1.msra.mxu0 %v764
    %1075 = vmatprep.subr.mxu0 0.0
    %1076 = vmatpush1.msra.mxu0 %v765
    %1077 = vmatprep.subr.mxu0 0.0
    %1078 = vmatpush1.msra.mxu0 %v766
    %1079 = vmatprep.subr.mxu0 0.0
    %1080 = vmatpush1.msra.mxu0 %v767
    %1081 = vmatprep.subr.mxu0 0.0
    %1082 = vmatpush1.msra.mxu0 %v768
    %1083 = vmatprep.subr.mxu0 0.0
    %1084 = vmatpush1.msra.mxu0 0.0
    %1085 = vmatprep.subr.mxu0 0.0
    %1086 = vmatpush1.msra.mxu0 0.0
    %1087 = vmatprep.subr.mxu0 0.0
    %1088 = vmatpush1.msra.mxu0 0.0
    %1089 = vmatprep.subr.mxu0 0.0
    %1090 = vmatpush1.msra.mxu0 0.0
    %1091 = vmatprep.subr.mxu0 0.0
    %1092 = vmatpush1.msra.mxu0 0.0
    %1093 = vmatprep.subr.mxu0 0.0
    %1094 = vmatpush1.msra.mxu0 0.0
    %1095 = vmatprep.subr.mxu0 0.0
    %1096 = vmatpush1.msra.mxu0 0.0
    %1097 = vmatprep.subr.mxu0 0.0
    %1098 = vmatpush1.msra.mxu0 0.0
    %1099 = vmatprep.subr.mxu0 0.0
    %1100 = vmatpush1.msra.mxu0 0.0
    %1101 = vmatprep.subr.mxu0 0.0
    %1102 = vmatpush1.msra.mxu0 0.0
    %1103 = vmatprep.subr.mxu0 0.0
    %1104 = vmatpush1.msra.mxu0 0.0
    %1105 = vmatprep.subr.mxu0 0.0
    %1106 = vmatpush1.msra.mxu0 0.0
    %1107 = vmatprep.subr.mxu0 0.0
    %1108 = vmatpush1.msra.mxu0 0.0
    %1109 = vmatprep.subr.mxu0 0.0
    %1110 = vmatpush1.msra.mxu0 0.0
    %1111 = vmatprep.subr.mxu0 0.0
    %1112 = vmatpush1.msra.mxu0 0.0
    %1113 = vmatprep.subr.mxu0 0.0
    %1114 = vmatpush1.msra.mxu0 0.0
    %1115 = vmatprep.subr.mxu0 0.0
    %1116 = vmatpush1.msra.mxu0 0.0
    %1117 = vmatprep.subr.mxu0 0.0
    %1118 = vmatpush1.msra.mxu0 0.0
    %1119 = vmatprep.subr.mxu0 0.0
    %1120 = vmatpush1.msra.mxu0 0.0
    %1121 = vmatprep.subr.mxu0 0.0
    %1122 = vmatpush1.msra.mxu0 0.0
    %1123 = vmatprep.subr.mxu0 0.0
    %1124 = vmatpush1.msra.mxu0 0.0
    %1125 = vmatprep.subr.mxu0 0.0
    %1126 = vmatpush1.msra.mxu0 0.0
    %1127 = vmatprep.subr.mxu0 0.0
    %1128 = vmatpush1.msra.mxu0 0.0
    %1129 = vmatprep.subr.mxu0 0.0
    %1130 = vmatpush1.msra.mxu0 0.0
    %1131 = vmatprep.mubr.f32.mxu0 0.0
    %1132 = vmatmul.mubr.f32.gmra.mrb[0].mxu0 %v408
    %v1133 = vpop.f32.mrb[0].mxu0
    %v1134 = vadd.f32 0.0, %v1133
    %v1135 = vpop.f32.mrb[0].mxu0
    %1136 = vdwg.mxu0
    %s1137 = sld [smem:[#allocation7 + $0x3]]
    %v1138 = vstv %s1137
    %v1139 = vmul.f32 %v1138, %v1134
    %v1140 = vadd.f32 %v1038, %v1139
    %s1141 = sld [smem:[#allocation7 + $0x7]]
    %v1142 = vstv %s1141
    %v1143 = vmul.f32 %v1142, %v1134
    %v1144 = vadd.f32 %v1042, %v1143
    %s1145 = sld [smem:[#allocation7 + $0xb]]
    %v1146 = vstv %s1145
    %v1147 = vmul.f32 %v1146, %v1134
    %v1148 = vadd.f32 %v1046, %v1147
    %s1149 = sld [smem:[#allocation7 + $0xf]]
    %v1150 = vstv %s1149
    %v1151 = vmul.f32 %v1150, %v1134
    %v1152 = vadd.f32 %v1050, %v1151
    %s1153 = sld [smem:[#allocation7 + $0x13]]
    %v1154 = vstv %s1153
    %v1155 = vmul.f32 %v1154, %v1134
    %v1156 = vadd.f32 %v1054, %v1155
    %s1157 = sld [smem:[#allocation7 + $0x17]]
    %v1158 = vstv %s1157
    %v1159 = vmul.f32 %v1158, %v1134
    %v1160 = vadd.f32 %v1058, %v1159
    %s1161 = sld [smem:[#allocation7 + $0x1b]]
    %v1162 = vstv %s1161
    %v1163 = vmul.f32 %v1162, %v1134
    %v1164 = vadd.f32 %v1062, %v1163
    %s1165 = sld [smem:[#allocation7 + $0x1f]]
    %v1166 = vstv %s1165
    %v1167 = vmul.f32 %v1166, %v1134
    %v1168 = vadd.f32 %v1066, %v1167
    %1170 = vrot.lane.b32.xlu0 %v1144, 16
    %v1171 = vpop.permute.xlu0 %1170
    %1174 = vrot.lane.b32.xlu0 %v1148, 32
    %v1175 = vpop.permute.xlu0 %1174
    %1178 = vrot.lane.b32.xlu0 %v1152, 48
    %v1179 = vpop.permute.xlu0 %1178
    %1182 = vrot.lane.b32.xlu0 %v1156, 64
    %v1183 = vpop.permute.xlu0 %1182
    %1186 = vrot.lane.b32.xlu0 %v1160, 80
    %v1187 = vpop.permute.xlu0 %1186
    %1190 = vrot.lane.b32.xlu0 %v1164, 96
    %v1191 = vpop.permute.xlu0 %1190
    %1194 = vrot.lane.b32.xlu0 %v1168, 112
    %v1195 = vpop.permute.xlu0 %1194
    %v1197 = vsel %vm540, %v1140, %v1171
    %v1198 = vsel %vm542, %v1197, %v1175
    %v1199 = vsel %vm544, %v1198, %v1179
    %v1200 = vsel %vm97, %v1199, %v1183
    %v1201 = vsel %vm547, %v1200, %v1187
    %v1202 = vsel %vm549, %v1201, %v1191
    %v1203 = vsel %vm551, %v1202, %v1195
    %v1204 = vld [vmem:[%s7] sm:$0xff]
    %v1205 = vld [vmem:[%s7 + $0x8] sm:$0xff]
    %v1206 = vld [vmem:[%s7 + $0x10] sm:$0xff]
    %v1207 = vld [vmem:[%s7 + $0x18] sm:$0xff]
    %v1208 = vld [vmem:[%s7 + $0x20] sm:$0xff]
    %v1209 = vld [vmem:[%s7 + $0x28] sm:$0xff]
    %v1210 = vld [vmem:[%s7 + $0x30] sm:$0xff]
    %v1211 = vld [vmem:[%s7 + $0x38] sm:$0xff]
    %v1212 = vld [vmem:[%s7 + $0x40] sm:$0xff]
    %v1213 = vld [vmem:[%s7 + $0x48] sm:$0xff]
    %v1214 = vld [vmem:[%s7 + $0x50] sm:$0xff]
    %v1215 = vld [vmem:[%s7 + $0x58] sm:$0xff]
    %v1216 = vld [vmem:[%s7 + $0x60] sm:$0xff]
    %v1217 = vld [vmem:[%s7 + $0x68] sm:$0xff]
    %v1218 = vld [vmem:[%s7 + $0x70] sm:$0xff]
    %v1219 = vld [vmem:[%s7 + $0x78] sm:$0xff]
    %1220 = vmatprep.subr.mxu0 0.0
    %1221 = vmatpush1.msra.mxu0 %v1204
    %1222 = vmatprep.subr.mxu0 0.0
    %1223 = vmatpush1.msra.mxu0 %v1205
    %1224 = vmatprep.subr.mxu0 0.0
    %1225 = vmatpush1.msra.mxu0 %v1206
    %1226 = vmatprep.subr.mxu0 0.0
    %1227 = vmatpush1.msra.mxu0 %v1207
    %1228 = vmatprep.subr.mxu0 0.0
    %1229 = vmatpush1.msra.mxu0 %v1208
    %1230 = vmatprep.subr.mxu0 0.0
    %1231 = vmatpush1.msra.mxu0 %v1209
    %1232 = vmatprep.subr.mxu0 0.0
    %1233 = vmatpush1.msra.mxu0 %v1210
    %1234 = vmatprep.subr.mxu0 0.0
    %1235 = vmatpush1.msra.mxu0 %v1211
    %1236 = vmatprep.subr.mxu0 0.0
    %1237 = vmatpush1.msra.mxu0 %v1212
    %1238 = vmatprep.subr.mxu0 0.0
    %1239 = vmatpush1.msra.mxu0 %v1213
    %1240 = vmatprep.subr.mxu0 0.0
    %1241 = vmatpush1.msra.mxu0 %v1214
    %1242 = vmatprep.subr.mxu0 0.0
    %1243 = vmatpush1.msra.mxu0 %v1215
    %1244 = vmatprep.subr.mxu0 0.0
    %1245 = vmatpush1.msra.mxu0 %v1216
    %1246 = vmatprep.subr.mxu0 0.0
    %1247 = vmatpush1.msra.mxu0 %v1217
    %1248 = vmatprep.subr.mxu0 0.0
    %1249 = vmatpush1.msra.mxu0 %v1218
    %1250 = vmatprep.subr.mxu0 0.0
    %1251 = vmatpush1.msra.mxu0 %v1219
    %1252 = vmatprep.subr.mxu0 0.0
    %1253 = vmatpush1.msra.mxu0 0.0
    %1254 = vmatprep.subr.mxu0 0.0
    %1255 = vmatpush1.msra.mxu0 0.0
    %1256 = vmatprep.subr.mxu0 0.0
    %1257 = vmatpush1.msra.mxu0 0.0
    %1258 = vmatprep.subr.mxu0 0.0
    %1259 = vmatpush1.msra.mxu0 0.0
    %1260 = vmatprep.subr.mxu0 0.0
    %1261 = vmatpush1.msra.mxu0 0.0
    %1262 = vmatprep.subr.mxu0 0.0
    %1263 = vmatpush1.msra.mxu0 0.0
    %1264 = vmatprep.subr.mxu0 0.0
    %1265 = vmatpush1.msra.mxu0 0.0
    %1266 = vmatprep.subr.mxu0 0.0
    %1267 = vmatpush1.msra.mxu0 0.0
    %1268 = vmatprep.subr.mxu0 0.0
    %1269 = vmatpush1.msra.mxu0 0.0
    %1270 = vmatprep.subr.mxu0 0.0
    %1271 = vmatpush1.msra.mxu0 0.0
    %1272 = vmatprep.subr.mxu0 0.0
    %1273 = vmatpush1.msra.mxu0 0.0
    %1274 = vmatprep.subr.mxu0 0.0
    %1275 = vmatpush1.msra.mxu0 0.0
    %1276 = vmatprep.subr.mxu0 0.0
    %1277 = vmatpush1.msra.mxu0 0.0
    %1278 = vmatprep.subr.mxu0 0.0
    %1279 = vmatpush1.msra.mxu0 0.0
    %1280 = vmatprep.subr.mxu0 0.0
    %1281 = vmatpush1.msra.mxu0 0.0
    %1282 = vmatprep.subr.mxu0 0.0
    %1283 = vmatpush1.msra.mxu0 0.0
    %1284 = vmatprep.mubr.f32.mxu0 0.0
    %1285 = vmatmul.mubr.f32.gmra.mrb[0].mxu0 %v87
    %v1286 = vpop.f32.mrb[0].mxu0
    %v1287 = vadd.f32 0.0, %v1286
    %v1288 = vpop.f32.mrb[0].mxu0
    %1289 = vdwg.mxu0
    %s1290 = sld [smem:[#allocation8]]
    %v1291 = vstv %s1290
    %v1292 = vmul.f32 %v1291, %v1287
    %s1293 = sld [smem:[#allocation8 + $0x2]]
    %v1294 = vstv %s1293
    %v1295 = vmul.f32 %v1294, %v1287
    %s1296 = sld [smem:[#allocation8 + $0x4]]
    %v1297 = vstv %s1296
    %v1298 = vmul.f32 %v1297, %v1287
    %s1299 = sld [smem:[#allocation8 + $0x6]]
    %v1300 = vstv %s1299
    %v1301 = vmul.f32 %v1300, %v1287
    %1302 = vmatprep.subr.mxu0 0.0
    %1303 = vmatpush1.msra.mxu0 %v1204
    %1304 = vmatprep.subr.mxu0 0.0
    %1305 = vmatpush1.msra.mxu0 %v1205
    %1306 = vmatprep.subr.mxu0 0.0
    %1307 = vmatpush1.msra.mxu0 %v1206
    %1308 = vmatprep.subr.mxu0 0.0
    %1309 = vmatpush1.msra.mxu0 %v1207
    %1310 = vmatprep.subr.mxu0 0.0
    %1311 = vmatpush1.msra.mxu0 %v1208
    %1312 = vmatprep.subr.mxu0 0.0
    %1313 = vmatpush1.msra.mxu0 %v1209
    %1314 = vmatprep.subr.mxu0 0.0
    %1315 = vmatpush1.msra.mxu0 %v1210
    %1316 = vmatprep.subr.mxu0 0.0
    %1317 = vmatpush1.msra.mxu0 %v1211
    %1318 = vmatprep.subr.mxu0 0.0
    %1319 = vmatpush1.msra.mxu0 %v1212
    %1320 = vmatprep.subr.mxu0 0.0
    %1321 = vmatpush1.msra.mxu0 %v1213
    %1322 = vmatprep.subr.mxu0 0.0
    %1323 = vmatpush1.msra.mxu0 %v1214
    %1324 = vmatprep.subr.mxu0 0.0
    %1325 = vmatpush1.msra.mxu0 %v1215
    %1326 = vmatprep.subr.mxu0 0.0
    %1327 = vmatpush1.msra.mxu0 %v1216
    %1328 = vmatprep.subr.mxu0 0.0
    %1329 = vmatpush1.msra.mxu0 %v1217
    %1330 = vmatprep.subr.mxu0 0.0
    %1331 = vmatpush1.msra.mxu0 %v1218
    %1332 = vmatprep.subr.mxu0 0.0
    %1333 = vmatpush1.msra.mxu0 %v1219
    %1334 = vmatprep.subr.mxu0 0.0
    %1335 = vmatpush1.msra.mxu0 0.0
    %1336 = vmatprep.subr.mxu0 0.0
    %1337 = vmatpush1.msra.mxu0 0.0
    %1338 = vmatprep.subr.mxu0 0.0
    %1339 = vmatpush1.msra.mxu0 0.0
    %1340 = vmatprep.subr.mxu0 0.0
    %1341 = vmatpush1.msra.mxu0 0.0
    %1342 = vmatprep.subr.mxu0 0.0
    %1343 = vmatpush1.msra.mxu0 0.0
    %1344 = vmatprep.subr.mxu0 0.0
    %1345 = vmatpush1.msra.mxu0 0.0
    %1346 = vmatprep.subr.mxu0 0.0
    %1347 = vmatpush1.msra.mxu0 0.0
    %1348 = vmatprep.subr.mxu0 0.0
    %1349 = vmatpush1.msra.mxu0 0.0
    %1350 = vmatprep.subr.mxu0 0.0
    %1351 = vmatpush1.msra.mxu0 0.0
    %1352 = vmatprep.subr.mxu0 0.0
    %1353 = vmatpush1.msra.mxu0 0.0
    %1354 = vmatprep.subr.mxu0 0.0
    %1355 = vmatpush1.msra.mxu0 0.0
    %1356 = vmatprep.subr.mxu0 0.0
    %1357 = vmatpush1.msra.mxu0 0.0
    %1358 = vmatprep.subr.mxu0 0.0
    %1359 = vmatpush1.msra.mxu0 0.0
    %1360 = vmatprep.subr.mxu0 0.0
    %1361 = vmatpush1.msra.mxu0 0.0
    %1362 = vmatprep.subr.mxu0 0.0
    %1363 = vmatpush1.msra.mxu0 0.0
    %1364 = vmatprep.subr.mxu0 0.0
    %1365 = vmatpush1.msra.mxu0 0.0
    %1366 = vmatprep.mubr.f32.mxu0 0.0
    %1367 = vmatmul.mubr.f32.gmra.mrb[0].mxu0 %v88
    %v1368 = vpop.f32.mrb[0].mxu0
    %v1369 = vadd.f32 0.0, %v1368
    %v1370 = vpop.f32.mrb[0].mxu0
    %1371 = vdwg.mxu0
    %s1372 = sld [smem:[#allocation8 + $0x1]]
    %v1373 = vstv %s1372
    %v1374 = vmul.f32 %v1373, %v1369
    %v1375 = vadd.f32 %v1292, %v1374
    %s1376 = sld [smem:[#allocation8 + $0x3]]
    %v1377 = vstv %s1376
    %v1378 = vmul.f32 %v1377, %v1369
    %v1379 = vadd.f32 %v1295, %v1378
    %s1380 = sld [smem:[#allocation8 + $0x5]]
    %v1381 = vstv %s1380
    %v1382 = vmul.f32 %v1381, %v1369
    %v1383 = vadd.f32 %v1298, %v1382
    %s1384 = sld [smem:[#allocation8 + $0x7]]
    %v1385 = vstv %s1384
    %v1386 = vmul.f32 %v1385, %v1369
    %v1387 = vadd.f32 %v1301, %v1386
    %1389 = vrot.lane.b32.xlu0 %v1379, 32
    %v1390 = vpop.permute.xlu0 %1389
    %1393 = vrot.lane.b32.xlu0 %v1383, 64
    %v1394 = vpop.permute.xlu0 %1393
    %1397 = vrot.lane.b32.xlu0 %v1387, 96
    %v1398 = vpop.permute.xlu0 %1397
    %v1400 = vsel %vm542, %v1375, %v1390
    %v1401 = vsel %vm97, %v1400, %v1394
    %v1402 = vsel %vm549, %v1401, %v1398
    %v1403 = vadd.f32 %v1203, %v1402
    %v1404 = vld [vmem:[%s10] sm:$0x1]
    %v1406 = vlaneseq
    %v1407 = vshrl.u32 %v1406, 7
    %v1408 = vsub.s32 0, %v1407
    %v1409 = vrot.slane %v1404, %v1408
    %v1411 = vadd.f32 %v1403, %v1409
    %1412 = vst [vmem:[#allocation10] sm:$0xff] %v760
    %1413 = vst [vmem:[#allocation10 + $0x8] sm:$0xff] %v1411
    // Predicated region
    $region62: #{tpu_custom_call.1} parent=1 // pred_check
      _
    $region63: #{tpu_custom_call.1} parent=1 // pred_check_branch
      %1415 = sbr.rel (0) target = $region65
    $region64: #{tpu_custom_call.1} parent=1 // pred_region
      %s1417 = ssub.s32 256, 256
      %1418 = vsyncadd [#allocation3], %s1417
      %s1420 = sshll.u32 [#allocation10], 4
      %s1421 = int_to_ptr.vmem [resolvable:$true] %s1420
      %1423 = dma.vmem_to_hbm [thread:$0]  %s1421, 256, %s11, [#allocation3]
    $region65: #{tpu_custom_call.1} parent=1 // pred_fallthru
      _
    // Predicated region
    $region66: #{tpu_custom_call.1} parent=1 // pred_check
      _
    $region67: #{tpu_custom_call.1} parent=1 // pred_check_branch
      %1425 = sbr.rel (0) target = $region69
    $region68: #{tpu_custom_call.1} parent=1 // pred_region
      %1426 = dma.done [#allocation3], 256
    $region69: #{tpu_custom_call.1} parent=1 // pred_fallthru
      _
    %1427 = vsyncpa [#allocation3], 1
    %1428 = vsyncpa [#allocation4], 1
    %1429 = vsyncpa [#allocation6], 1
    %1430 = vsyncpa [#allocation9], 1

</llo_original>
